<compile_context>
chip_gen: v7x
topology: tpu7x:2x2x1
jax: 0.10.0
libtpu: 0.0.40
codegen_flags: <defaults>
</compile_context>

<pallas_src>
import functools

import jax
import jax.numpy as jnp
from jax.experimental import pallas as pl
from jax.experimental.pallas import tpu as pltpu

BN_EPS = 1e-5
LANE = 128
SUBLANE = 8
VMEM_BUDGET = 24 * 1024 * 1024  # conservative tile-selection budget (all gens)


def _round_up(x, m):
    return (x + m - 1) // m * m


def _vmem_bytes(TH, Wp, Wi, Cp, Coutp):
    """Rough per-step VMEM footprint (double-buffered blocks + scratch + temps)."""
    f32, bf16 = 4, 2
    inp = 2 * TH * Wi * Cp * f32 + 2 * 2 * Wi * Cp * f32      # center + 2 halo rows
    outp = 2 * TH * Wp * Coutp * f32
    band = (TH + 2) * Wi * Cp * f32                           # assembled band scratch
    ysc = TH * Wp * Cp * bf16                                 # bf16 dw output scratch
    interm = 3 * TH * Wp * Coutp * f32                        # matmul out + activations
    wts = 2 * (9 * Cp * f32 + Cp * f32 + Cp * Coutp * bf16 + Coutp * f32)
    return inp + outp + band + ysc + interm + wts


def _pick_row_tile(H, Wp, Wi, Cp, Coutp, budget=VMEM_BUDGET):
    """Largest divisor of H whose footprint fits the VMEM budget (TH=1 always works)."""
    best = 1
    for th in range(1, H + 1):
        if H % th == 0 and _vmem_bytes(th, Wp, Wi, Cp, Coutp) <= budget:
            best = th
    return best


def _dsconv_kernel(TH, CH, Wp,
                   center_ref, top_ref, bot_ref, wdw_ref, b1_ref, wpw_ref, b2_ref,
                   o_ref, band_ref, y_ref):
    """One program = one (TH, Wp, Coutp) output row-tile of one batch element.

    center_ref : (TH, Wi, Cp) f32   rows [t*TH, t*TH+TH) of the W/C-padded image
    top_ref    : (1,  Wi, Cp) f32   row t*TH-1 (clamped; zero-masked when t == 0)
    bot_ref    : (1,  Wi, Cp) f32   row t*TH+TH (clamped; zero-masked when t == T-1)
    wdw_ref    : (3, 3, Cp)   f32   depthwise weights with BN1 scale folded in
    b1_ref     : (1, Cp)      f32   folded BN1 bias
    wpw_ref    : (Cp, Coutp)  bf16  pointwise weights with BN2 scale folded in
    b2_ref     : (1, Coutp)   f32   folded BN2 bias
    o_ref      : (TH, Wp, Coutp) f32
    band_ref   : (TH+2, Wi, Cp) f32 VMEM scratch: vertical-halo band
    y_ref      : (TH, Wp, Cp) bf16  VMEM scratch: depthwise + SiLU output
    """
    t = pl.program_id(1)
    last_t = pl.num_programs(1) - 1
    Cp = center_ref.shape[-1]
    Coutp = o_ref.shape[-1]

    # ---- assemble the (TH+2)-row band: [top halo, center rows, bottom halo] ----
    # Input columns: col 0 = left halo (zero), cols 1..W = image, rest zero pad.
    band_ref[pl.ds(1, TH)] = center_ref[...]
    band_ref[pl.ds(0, 1)] = jnp.where(t > 0, top_ref[...], 0.0)
    band_ref[pl.ds(TH + 1, 1)] = jnp.where(t < last_t, bot_ref[...], 0.0)

    # ---- hoisted per-tap weights / bias (Cp-wide rows) ----
    w = wdw_ref[...]                                              # (3, 3, Cp)
    wtap = [[w[kh:kh + 1, kw:kw + 1, :] for kw in range(3)] for kh in range(3)]
    b1 = b1_ref[...].reshape(1, 1, Cp)

    nch = pl.cdiv(TH, CH)

    # ---- depthwise 3x3 + bn1 bias + SiLU in CH-row chunks -----------------
    # Chunking keeps the f32 accumulator + one slab live (not 3 full bands),
    # so the VALU (not the vector-store slot) is the binding unit.
    @pl.loop(0, nch)
    def _(i):
        c0 = jnp.minimum(i * CH, TH - CH)       # clamp: last chunk may overlap
        acc = None
        for kh in range(3):
            for kw in range(3):
                slab = band_ref[pl.ds(c0 + kh, CH), pl.ds(kw, Wp), :]
                term = slab * wtap[kh][kw]
                acc = term + b1 if acc is None else acc + term
        yc = acc * jax.nn.sigmoid(acc)          # SiLU (sigmoid on the EUP)
        y_ref[pl.ds(c0, CH)] = yc.astype(y_ref.dtype)

    # ---- pointwise 1x1 conv: (TH*Wp, Cp) x (Cp, Coutp) bf16 MXU matmul -----
    y = y_ref[...]                                              # (TH, Wp, Cp) bf16
    z = jnp.dot(y.reshape(TH * Wp, Cp), wpw_ref[...],
                preferred_element_type=jnp.float32)             # (TH*Wp, Coutp) f32

    # ---- bn2 bias (scale pre-folded into wpw) + SiLU -----------------------
    z = z + b2_ref[...]
    z = z * jax.nn.sigmoid(z)

    # ---- residual skip: original image columns of the center rows (f32) ----
    shortcut = center_ref[:, pl.ds(1, Wp), :]                   # (TH, Wp, Cp)
    o_ref[...] = (z.reshape(TH, Wp, Coutp) + shortcut).astype(o_ref.dtype)


@jax.jit
def depthwise_separable_conv(x_nchw, wdw, g1, be1, rm1, rv1, wpw, g2, be2, rm2, rv2):
    """x_nchw: (N, C, H, W) f32 (PyTorch layout). Returns (N, Cout, H, W) f32."""
    N, C, H, W = x_nchw.shape
    Cout = wpw.shape[1]
    assert C == Cout, "skip connection requires in_chs == out_chs"

    # ---- fold BatchNorm (inference, running stats) into the conv weights ----
    s1 = g1 / jnp.sqrt(rv1 + BN_EPS)
    b1 = be1 - rm1 * s1
    s2 = g2 / jnp.sqrt(rv2 + BN_EPS)
    b2 = be2 - rm2 * s2
    wdw_f = wdw * s1[None, None, :]                      # (3, 3, C)
    wpw_f = wpw * s2[None, :]                            # (C, Cout)

    # ---- layout: NHWC, lane-padded channels, 8-aligned width, left halo col --
    Cp = _round_up(C, LANE)
    Coutp = _round_up(Cout, LANE)
    Wp = _round_up(W, SUBLANE)        # output tile width (no-op reshapes, dense stores)
    Wi = Wp + SUBLANE                 # input width: col 0 = left halo, 1..W image, rest 0

    x = jnp.transpose(x_nchw, (0, 2, 3, 1)).astype(jnp.float32)          # NHWC
    x_in = jnp.pad(x, ((0, 0), (0, 0), (1, Wi - W - 1), (0, Cp - C)))    # (N, H, Wi, Cp)

    wdw_p = jnp.pad(wdw_f, ((0, 0), (0, 0), (0, Cp - C))).astype(jnp.float32)
    b1_p = jnp.pad(b1, (0, Cp - C)).reshape(1, Cp).astype(jnp.float32)
    wpw_p = jnp.pad(wpw_f, ((0, Cp - C), (0, Coutp - Cout))).astype(jnp.bfloat16)
    b2_p = jnp.pad(b2, (0, Coutp - Cout)).reshape(1, Coutp).astype(jnp.float32)

    # ---- tiling: largest divisor of H within the VMEM budget ----------------
    TH = _pick_row_tile(H, Wp, Wi, Cp, Coutp)
    T = H // TH
    # Row-chunk size: keep the per-chunk f32 accumulator around <= ~32 vregs.
    CH = max(1, min(8, TH, (32 * 4096) // max(Wp * Cp * 4, 1)))

    grid = (N, T)
    kernel = functools.partial(_dsconv_kernel, TH, CH, Wp)

    flops = int(N * H * Wp * (2 * 9 * Cp + 2 * Cp * Coutp))
    transc = int(N * H * Wp * (Cp + Coutp))               # two SiLU sigmoids
    bytes_acc = int(N * H * Wi * Cp * 4 + N * H * Wp * Coutp * 4
                    + wdw_p.size * 4 + b1_p.size * 4 + wpw_p.size * 2 + b2_p.size * 4)

    est = _vmem_bytes(TH, Wp, Wi, Cp, Coutp)
    vmem_limit = int(min(64 * 2 ** 20, max(32 * 2 ** 20, 2 * est)))

    out_nhwc = pl.pallas_call(
        kernel,
        out_shape=jax.ShapeDtypeStruct((N, H, Wp, Coutp), jnp.float32),
        grid_spec=pltpu.PrefetchScalarGridSpec(
            num_scalar_prefetch=0,
            grid=grid,
            in_specs=[
                # banded center rows of this tile (same array passed 3x below)
                pl.BlockSpec((None, TH, Wi, Cp), lambda n, t: (n, t, 0, 0)),
                # 1-row top halo (clamped; zero-masked in kernel at t == 0)
                pl.BlockSpec((None, 1, Wi, Cp),
                             lambda n, t: (n, jnp.maximum(t * TH - 1, 0), 0, 0)),
                # 1-row bottom halo (clamped; zero-masked in kernel at t == T-1)
                pl.BlockSpec((None, 1, Wi, Cp),
                             lambda n, t: (n, jnp.minimum(t * TH + TH, H - 1), 0, 0)),
                pl.BlockSpec((3, 3, Cp), lambda n, t: (0, 0, 0)),
                pl.BlockSpec((1, Cp), lambda n, t: (0, 0)),
                pl.BlockSpec((Cp, Coutp), lambda n, t: (0, 0)),
                pl.BlockSpec((1, Coutp), lambda n, t: (0, 0)),
            ],
            out_specs=pl.BlockSpec((None, TH, Wp, Coutp), lambda n, t: (n, t, 0, 0)),
            scratch_shapes=[
                pltpu.VMEM((TH + 2, Wi, Cp), jnp.float32),   # assembled halo band
                pltpu.VMEM((TH, Wp, Cp), jnp.bfloat16),      # depthwise+SiLU output
            ],
        ),
        compiler_params=pltpu.CompilerParams(
            dimension_semantics=("parallel", "parallel"),
            vmem_limit_bytes=vmem_limit),
        cost_estimate=pl.CostEstimate(flops=flops,
                                      transcendentals=transc,
                                      bytes_accessed=bytes_acc),
    )(x_in, x_in, x_in, wdw_p, b1_p, wpw_p, b2_p)

    out = out_nhwc[:, :, :W, :Cout]                      # drop W/channel padding
    return jnp.transpose(out, (0, 3, 1, 2))              # back to NCHW


def make_params(key, in_chs, out_chs, dw_kernel_size=3):
    """Deterministic synthetic parameters mirroring the PyTorch module:
    conv weights (no bias) + BatchNorm (gamma, beta, running_mean, running_var)
    for bn1 and bn2."""
    ks = jax.random.split(key, 10)
    # Depthwise weight: PyTorch (C, 1, 3, 3) -> layout (kh, kw, C).
    wdw = 0.1 * jax.random.normal(ks[0], (dw_kernel_size, dw_kernel_size, in_chs), jnp.float32)
    # Pointwise weight: PyTorch (Cout, C, 1, 1) -> layout (C, Cout).
    wpw = 0.1 * jax.random.normal(ks[1], (in_chs, out_chs), jnp.float32)

    g1 = jax.random.uniform(ks[2], (in_chs,), jnp.float32, 0.5, 1.5)
    be1 = 0.1 * jax.random.normal(ks[3], (in_chs,), jnp.float32)
    rm1 = 0.1 * jax.random.normal(ks[4], (in_chs,), jnp.float32)
    rv1 = jax.random.uniform(ks[5], (in_chs,), jnp.float32, 0.5, 1.5)

    g2 = jax.random.uniform(ks[6], (out_chs,), jnp.float32, 0.5, 1.5)
    be2 = 0.1 * jax.random.normal(ks[7], (out_chs,), jnp.float32)
    rm2 = 0.1 * jax.random.normal(ks[8], (out_chs,), jnp.float32)
    rv2 = jax.random.uniform(ks[9], (out_chs,), jnp.float32, 0.5, 1.5)

    return (wdw, g1, be1, rm1, rv1, wpw, g2, be2, rm2, rv2)


def reference_dsconv(x_nchw, wdw, g1, be1, rm1, rv1, wpw, g2, be2, rm2, rv2):
    """Pure-JAX reference of the same forward (mirrors the bf16 MXU cast)."""
    x = jnp.transpose(x_nchw, (0, 2, 3, 1)).astype(jnp.float32)      # NHWC
    C = x.shape[-1]
    s1 = g1 / jnp.sqrt(rv1 + BN_EPS)
    b1 = be1 - rm1 * s1
    s2 = g2 / jnp.sqrt(rv2 + BN_EPS)
    b2 = be2 - rm2 * s2

    dw = jax.lax.conv_general_dilated(
        x, wdw.reshape(3, 3, 1, C), window_strides=(1, 1), padding="SAME",
        dimension_numbers=("NHWC", "HWIO", "NHWC"), feature_group_count=C)
    y = dw * s1 + b1
    y = y * jax.nn.sigmoid(y)

    z = jnp.einsum("nhwc,co->nhwo",
                   y.astype(jnp.bfloat16),
                   (wpw * s2[None, :]).astype(jnp.bfloat16),
                   preferred_element_type=jnp.float32)
    z = z + b2
    z = z * jax.nn.sigmoid(z)
    out = z + x
    return jnp.transpose(out, (0, 3, 1, 2))


if __name__ == "__main__":
    key = jax.random.PRNGKey(0)
    kx, kp = jax.random.split(key)

    N, C, H, W = 2, 4, 16, 16            # in_chs == out_chs -> skip active
    x = jax.random.normal(kx, (N, C, H, W), jnp.float32)   # NCHW, like PyTorch

    params = make_params(kp, in_chs=C, out_chs=C)
    y = depthwise_separable_conv(x, *params)
    jax.block_until_ready(y)

    assert y.shape == (N, C, H, W) and y.dtype == jnp.float32

    y_ref = reference_dsconv(x, *params)
    max_err = float(jnp.max(jnp.abs(y - y_ref)))
    assert max_err < 5e-3, f"mismatch vs reference: max abs err = {max_err}"

    print("KERNEL_OK")
</pallas_src>

<mosaic_0001>
module attributes {stable_mosaic.version = 11 : i64} {
  func.func @_dsconv_kernel(%arg0: i32, %arg1: i32, %arg2: memref<1x16x24x128xf32, #tpu.memory_space<vmem>>, %arg3: memref<1x1x24x128xf32, #tpu.memory_space<vmem>>, %arg4: memref<1x1x24x128xf32, #tpu.memory_space<vmem>>, %arg5: memref<3x3x128xf32, #tpu.memory_space<vmem>>, %arg6: memref<1x128xf32, #tpu.memory_space<vmem>>, %arg7: memref<128x128xbf16, #tpu.memory_space<vmem>>, %arg8: memref<1x128xf32, #tpu.memory_space<vmem>>, %arg9: memref<1x16x16x128xf32, #tpu.memory_space<vmem>>, %arg10: memref<18x24x128xf32, #tpu.memory_space<vmem>>, %arg11: memref<16x16x128xbf16, #tpu.memory_space<vmem>>) attributes {dimension_semantics = [#tpu.dimension_semantics<parallel>, #tpu.dimension_semantics<parallel>], iteration_bounds = array<i64: 2, 1>, scalar_prefetch = 0 : i64, scratch_operands = 2 : i64, tpu.core_type = #tpu.core_type<tc>, window_params = [{transform_indices = @transform_0, window_bounds = array<i64: 1, 16, 24, 128>}, {transform_indices = @transform_1, window_bounds = array<i64: 1, 1, 24, 128>}, {transform_indices = @transform_2, window_bounds = array<i64: 1, 1, 24, 128>}, {pipeline_mode = #tpu.pipeline_mode<synchronous>, transform_indices = @transform_3, window_bounds = array<i64: 3, 3, 128>}, {pipeline_mode = #tpu.pipeline_mode<synchronous>, transform_indices = @transform_4, window_bounds = array<i64: 1, 128>}, {pipeline_mode = #tpu.pipeline_mode<synchronous>, transform_indices = @transform_5, window_bounds = array<i64: 128, 128>}, {pipeline_mode = #tpu.pipeline_mode<synchronous>, transform_indices = @transform_6, window_bounds = array<i64: 1, 128>}, {transform_indices = @transform_7, window_bounds = array<i64: 1, 16, 16, 128>}]} {
    %c0 = arith.constant 0 : index
    %c0_0 = arith.constant 0 : index
    %c0_1 = arith.constant 0 : index
    %c0_2 = arith.constant 0 : index
    %0 = vector.load %arg2[%c0, %c0_0, %c0_1, %c0_2] : memref<1x16x24x128xf32, #tpu.memory_space<vmem>>, vector<1x16x24x128xf32>
    %1 = vector.shape_cast %0 : vector<1x16x24x128xf32> to vector<16x24x128xf32>
    %c1 = arith.constant 1 : index
    %c0_3 = arith.constant 0 : index
    %c0_4 = arith.constant 0 : index
    %2 = vector.load %arg10[%c1, %c0_3, %c0_4] : memref<18x24x128xf32, #tpu.memory_space<vmem>>, vector<16x24x128xf32>
    tpu.vector_store %arg10[%c1, %c0_3, %c0_4], %1 {strides = array<i32>} : memref<18x24x128xf32, #tpu.memory_space<vmem>>, vector<16x24x128xf32>,
    %c0_i32 = arith.constant 0 : i32
    %3 = arith.cmpi sgt, %arg1, %c0_i32 : i32
    %c0_5 = arith.constant 0 : index
    %c0_6 = arith.constant 0 : index
    %c0_7 = arith.constant 0 : index
    %c0_8 = arith.constant 0 : index
    %4 = vector.load %arg3[%c0_5, %c0_6, %c0_7, %c0_8] : memref<1x1x24x128xf32, #tpu.memory_space<vmem>>, vector<1x1x24x128xf32>
    %5 = vector.shape_cast %4 : vector<1x1x24x128xf32> to vector<1x24x128xf32>
    %cst = arith.constant 0.000000e+00 : f32
    %6 = vector.broadcast %cst : f32 to vector<1x24x128xf32>
    %7 = arith.select %3, %5, %6 : vector<1x24x128xf32>
    %c0_9 = arith.constant 0 : index
    %c0_10 = arith.constant 0 : index
    %c0_11 = arith.constant 0 : index
    %8 = vector.load %arg10[%c0_9, %c0_10, %c0_11] : memref<18x24x128xf32, #tpu.memory_space<vmem>>, vector<1x24x128xf32>
    tpu.vector_store %arg10[%c0_9, %c0_10, %c0_11], %7 {strides = array<i32>} : memref<18x24x128xf32, #tpu.memory_space<vmem>>, vector<1x24x128xf32>,
    %c0_i32_12 = arith.constant 0 : i32
    %9 = arith.cmpi slt, %arg1, %c0_i32_12 : i32
    %c0_13 = arith.constant 0 : index
    %c0_14 = arith.constant 0 : index
    %c0_15 = arith.constant 0 : index
    %c0_16 = arith.constant 0 : index
    %10 = vector.load %arg4[%c0_13, %c0_14, %c0_15, %c0_16] : memref<1x1x24x128xf32, #tpu.memory_space<vmem>>, vector<1x1x24x128xf32>
    %11 = vector.shape_cast %10 : vector<1x1x24x128xf32> to vector<1x24x128xf32>
    %cst_17 = arith.constant 0.000000e+00 : f32
    %12 = vector.broadcast %cst_17 : f32 to vector<1x24x128xf32>
    %13 = arith.select %9, %11, %12 : vector<1x24x128xf32>
    %c17 = arith.constant 17 : index
    %c0_18 = arith.constant 0 : index
    %c0_19 = arith.constant 0 : index
    %14 = vector.load %arg10[%c17, %c0_18, %c0_19] : memref<18x24x128xf32, #tpu.memory_space<vmem>>, vector<1x24x128xf32>
    tpu.vector_store %arg10[%c17, %c0_18, %c0_19], %13 {strides = array<i32>} : memref<18x24x128xf32, #tpu.memory_space<vmem>>, vector<1x24x128xf32>,
    %c0_20 = arith.constant 0 : index
    %c0_21 = arith.constant 0 : index
    %c0_22 = arith.constant 0 : index
    %15 = vector.load %arg5[%c0_20, %c0_21, %c0_22] : memref<3x3x128xf32, #tpu.memory_space<vmem>>, vector<3x3x128xf32>
    %16 = vector.extract_strided_slice %15 {offsets = [0, 0, 0], sizes = [1, 1, 128], strides = [1, 1, 1]} : vector<3x3x128xf32> to vector<1x1x128xf32>
    %17 = vector.extract_strided_slice %15 {offsets = [0, 1, 0], sizes = [1, 1, 128], strides = [1, 1, 1]} : vector<3x3x128xf32> to vector<1x1x128xf32>
    %18 = vector.extract_strided_slice %15 {offsets = [0, 2, 0], sizes = [1, 1, 128], strides = [1, 1, 1]} : vector<3x3x128xf32> to vector<1x1x128xf32>
    %19 = vector.extract_strided_slice %15 {offsets = [1, 0, 0], sizes = [1, 1, 128], strides = [1, 1, 1]} : vector<3x3x128xf32> to vector<1x1x128xf32>
    %20 = vector.extract_strided_slice %15 {offsets = [1, 1, 0], sizes = [1, 1, 128], strides = [1, 1, 1]} : vector<3x3x128xf32> to vector<1x1x128xf32>
    %21 = vector.extract_strided_slice %15 {offsets = [1, 2, 0], sizes = [1, 1, 128], strides = [1, 1, 1]} : vector<3x3x128xf32> to vector<1x1x128xf32>
    %22 = vector.extract_strided_slice %15 {offsets = [2, 0, 0], sizes = [1, 1, 128], strides = [1, 1, 1]} : vector<3x3x128xf32> to vector<1x1x128xf32>
    %23 = vector.extract_strided_slice %15 {offsets = [2, 1, 0], sizes = [1, 1, 128], strides = [1, 1, 1]} : vector<3x3x128xf32> to vector<1x1x128xf32>
    %24 = vector.extract_strided_slice %15 {offsets = [2, 2, 0], sizes = [1, 1, 128], strides = [1, 1, 1]} : vector<3x3x128xf32> to vector<1x1x128xf32>
    %c0_23 = arith.constant 0 : index
    %c0_24 = arith.constant 0 : index
    %25 = vector.load %arg6[%c0_23, %c0_24] : memref<1x128xf32, #tpu.memory_space<vmem>>, vector<1x128xf32>
    %26 = vector.shape_cast %25 : vector<1x128xf32> to vector<1x1x128xf32>
    %c0_i32_25 = arith.constant 0 : i32
    %c2_i32 = arith.constant 2 : i32
    %27 = arith.addi %c0_i32_25, %c2_i32 : i32
    %c1_i32 = arith.constant 1 : i32
    scf.for %arg12 = %c0_i32_25 to %27 step %c1_i32  : i32 {
      %c1_i32_44 = arith.constant 1 : i32
      %48 = arith.muli %arg12, %c1_i32_44 : i32
      %c0_i32_45 = arith.constant 0 : i32
      %49 = arith.addi %c0_i32_45, %48 : i32
      %c8_i32 = arith.constant 8 : i32
      %50 = arith.muli %49, %c8_i32 : i32
      %c8_i32_46 = arith.constant 8 : i32
      %51 = arith.minsi %50, %c8_i32_46 : i32
      %c0_i32_47 = arith.constant 0 : i32
      %52 = arith.addi %51, %c0_i32_47 : i32
      %53 = arith.index_cast %52 : i32 to index
      %c0_48 = arith.constant 0 : index
      %c0_49 = arith.constant 0 : index
      %54 = vector.load %arg10[%53, %c0_48, %c0_49] : memref<18x24x128xf32, #tpu.memory_space<vmem>>, vector<8x16x128xf32>
      %55 = vector.broadcast %16 : vector<1x1x128xf32> to vector<8x16x128xf32>
      %56 = arith.mulf %54, %55 : vector<8x16x128xf32>
      %57 = vector.broadcast %26 : vector<1x1x128xf32> to vector<8x16x128xf32>
      %58 = arith.addf %56, %57 : vector<8x16x128xf32>
      %c0_i32_50 = arith.constant 0 : i32
      %59 = arith.addi %51, %c0_i32_50 : i32
      %60 = arith.index_cast %59 : i32 to index
      %c1_51 = arith.constant 1 : index
      %c0_52 = arith.constant 0 : index
      %61 = vector.load %arg10[%60, %c1_51, %c0_52] : memref<18x24x128xf32, #tpu.memory_space<vmem>>, vector<8x16x128xf32>
      %62 = vector.broadcast %17 : vector<1x1x128xf32> to vector<8x16x128xf32>
      %63 = arith.mulf %61, %62 : vector<8x16x128xf32>
      %64 = arith.addf %58, %63 : vector<8x16x128xf32>
      %c0_i32_53 = arith.constant 0 : i32
      %65 = arith.addi %51, %c0_i32_53 : i32
      %66 = arith.index_cast %65 : i32 to index
      %c2 = arith.constant 2 : index
      %c0_54 = arith.constant 0 : index
      %67 = vector.load %arg10[%66, %c2, %c0_54] : memref<18x24x128xf32, #tpu.memory_space<vmem>>, vector<8x16x128xf32>
      %68 = vector.broadcast %18 : vector<1x1x128xf32> to vector<8x16x128xf32>
      %69 = arith.mulf %67, %68 : vector<8x16x128xf32>
      %70 = arith.addf %64, %69 : vector<8x16x128xf32>
      %c1_i32_55 = arith.constant 1 : i32
      %71 = arith.addi %51, %c1_i32_55 : i32
      %72 = arith.index_cast %71 : i32 to index
      %c0_56 = arith.constant 0 : index
      %c0_57 = arith.constant 0 : index
      %73 = vector.load %arg10[%72, %c0_56, %c0_57] : memref<18x24x128xf32, #tpu.memory_space<vmem>>, vector<8x16x128xf32>
      %74 = vector.broadcast %19 : vector<1x1x128xf32> to vector<8x16x128xf32>
      %75 = arith.mulf %73, %74 : vector<8x16x128xf32>
      %76 = arith.addf %70, %75 : vector<8x16x128xf32>
      %c1_i32_58 = arith.constant 1 : i32
      %77 = arith.addi %51, %c1_i32_58 : i32
      %78 = arith.index_cast %77 : i32 to index
      %c1_59 = arith.constant 1 : index
      %c0_60 = arith.constant 0 : index
      %79 = vector.load %arg10[%78, %c1_59, %c0_60] : memref<18x24x128xf32, #tpu.memory_space<vmem>>, vector<8x16x128xf32>
      %80 = vector.broadcast %20 : vector<1x1x128xf32> to vector<8x16x128xf32>
      %81 = arith.mulf %79, %80 : vector<8x16x128xf32>
      %82 = arith.addf %76, %81 : vector<8x16x128xf32>
      %c1_i32_61 = arith.constant 1 : i32
      %83 = arith.addi %51, %c1_i32_61 : i32
      %84 = arith.index_cast %83 : i32 to index
      %c2_62 = arith.constant 2 : index
      %c0_63 = arith.constant 0 : index
      %85 = vector.load %arg10[%84, %c2_62, %c0_63] : memref<18x24x128xf32, #tpu.memory_space<vmem>>, vector<8x16x128xf32>
      %86 = vector.broadcast %21 : vector<1x1x128xf32> to vector<8x16x128xf32>
      %87 = arith.mulf %85, %86 : vector<8x16x128xf32>
      %88 = arith.addf %82, %87 : vector<8x16x128xf32>
      %c2_i32_64 = arith.constant 2 : i32
      %89 = arith.addi %51, %c2_i32_64 : i32
      %90 = arith.index_cast %89 : i32 to index
      %c0_65 = arith.constant 0 : index
      %c0_66 = arith.constant 0 : index
      %91 = vector.load %arg10[%90, %c0_65, %c0_66] : memref<18x24x128xf32, #tpu.memory_space<vmem>>, vector<8x16x128xf32>
      %92 = vector.broadcast %22 : vector<1x1x128xf32> to vector<8x16x128xf32>
      %93 = arith.mulf %91, %92 : vector<8x16x128xf32>
      %94 = arith.addf %88, %93 : vector<8x16x128xf32>
      %c2_i32_67 = arith.constant 2 : i32
      %95 = arith.addi %51, %c2_i32_67 : i32
      %96 = arith.index_cast %95 : i32 to index
      %c1_68 = arith.constant 1 : index
      %c0_69 = arith.constant 0 : index
      %97 = vector.load %arg10[%96, %c1_68, %c0_69] : memref<18x24x128xf32, #tpu.memory_space<vmem>>, vector<8x16x128xf32>
      %98 = vector.broadcast %23 : vector<1x1x128xf32> to vector<8x16x128xf32>
      %99 = arith.mulf %97, %98 : vector<8x16x128xf32>
      %100 = arith.addf %94, %99 : vector<8x16x128xf32>
      %c2_i32_70 = arith.constant 2 : i32
      %101 = arith.addi %51, %c2_i32_70 : i32
      %102 = arith.index_cast %101 : i32 to index
      %c2_71 = arith.constant 2 : index
      %c0_72 = arith.constant 0 : index
      %103 = vector.load %arg10[%102, %c2_71, %c0_72] : memref<18x24x128xf32, #tpu.memory_space<vmem>>, vector<8x16x128xf32>
      %104 = vector.broadcast %24 : vector<1x1x128xf32> to vector<8x16x128xf32>
      %105 = arith.mulf %103, %104 : vector<8x16x128xf32>
      %106 = arith.addf %100, %105 : vector<8x16x128xf32>
      %107 = arith.negf %106 : vector<8x16x128xf32>
      %108 = math.exp %107 : vector<8x16x128xf32>
      %cst_73 = arith.constant 1.000000e+00 : f32
      %109 = vector.broadcast %cst_73 : f32 to vector<8x16x128xf32>
      %110 = arith.addf %109, %108 : vector<8x16x128xf32>
      %111 = arith.divf %109, %110 : vector<8x16x128xf32>
      %112 = arith.mulf %106, %111 : vector<8x16x128xf32>
      %113 = arith.truncf %112 : vector<8x16x128xf32> to vector<8x16x128xbf16>
      %114 = arith.index_cast %51 : i32 to index
      %c0_74 = arith.constant 0 : index
      %c0_75 = arith.constant 0 : index
      %115 = vector.load %arg11[%114, %c0_74, %c0_75] : memref<16x16x128xbf16, #tpu.memory_space<vmem>>, vector<8x16x128xbf16>
      tpu.vector_store %arg11[%114, %c0_74, %c0_75], %113 {strides = array<i32>} : memref<16x16x128xbf16, #tpu.memory_space<vmem>>, vector<8x16x128xbf16>,
    }
    %c2_i32_26 = arith.constant 2 : i32
    %c0_27 = arith.constant 0 : index
    %c0_28 = arith.constant 0 : index
    %c0_29 = arith.constant 0 : index
    %28 = vector.load %arg11[%c0_27, %c0_28, %c0_29] : memref<16x16x128xbf16, #tpu.memory_space<vmem>>, vector<16x16x128xbf16>
    %29 = vector.shape_cast %28 : vector<16x16x128xbf16> to vector<256x128xbf16>
    %c0_30 = arith.constant 0 : index
    %c0_31 = arith.constant 0 : index
    %30 = vector.load %arg7[%c0_30, %c0_31] : memref<128x128xbf16, #tpu.memory_space<vmem>>, vector<128x128xbf16>
    %cst_32 = arith.constant dense<0.000000e+00> : vector<256x128xf32>
    %31 = tpu.matmul %29, %30, %cst_32 {dimension_numbers = #tpu.dot_dimension_numbers<[1], [0], [0], [1], [0, 0, 1, 1], [], []>} : vector<256x128xbf16>, vector<128x128xbf16>, vector<256x128xf32> -> vector<256x128xf32>
    %c0_33 = arith.constant 0 : index
    %c0_34 = arith.constant 0 : index
    %32 = vector.load %arg8[%c0_33, %c0_34] : memref<1x128xf32, #tpu.memory_space<vmem>>, vector<1x128xf32>
    %33 = vector.broadcast %32 : vector<1x128xf32> to vector<256x128xf32>
    %34 = arith.addf %31, %33 : vector<256x128xf32>
    %35 = arith.negf %34 : vector<256x128xf32>
    %36 = math.exp %35 : vector<256x128xf32>
    %cst_35 = arith.constant 1.000000e+00 : f32
    %37 = vector.broadcast %cst_35 : f32 to vector<256x128xf32>
    %38 = arith.addf %37, %36 : vector<256x128xf32>
    %39 = arith.divf %37, %38 : vector<256x128xf32>
    %40 = arith.mulf %34, %39 : vector<256x128xf32>
    %c0_36 = arith.constant 0 : index
    %c0_37 = arith.constant 0 : index
    %c1_38 = arith.constant 1 : index
    %c0_39 = arith.constant 0 : index
    %41 = vector.load %arg2[%c0_36, %c0_37, %c1_38, %c0_39] : memref<1x16x24x128xf32, #tpu.memory_space<vmem>>, vector<1x16x16x128xf32>
    %42 = vector.shape_cast %41 : vector<1x16x16x128xf32> to vector<16x16x128xf32>
    %43 = vector.shape_cast %40 : vector<256x128xf32> to vector<16x16x128xf32>
    %44 = arith.addf %43, %42 : vector<16x16x128xf32>
    %c0_40 = arith.constant 0 : index
    %c0_41 = arith.constant 0 : index
    %c0_42 = arith.constant 0 : index
    %c0_43 = arith.constant 0 : index
    %45 = vector.load %arg9[%c0_40, %c0_41, %c0_42, %c0_43] : memref<1x16x16x128xf32, #tpu.memory_space<vmem>>, vector<1x16x16x128xf32>
    %46 = vector.shape_cast %45 : vector<1x16x16x128xf32> to vector<16x16x128xf32>
    %47 = vector.shape_cast %44 : vector<16x16x128xf32> to vector<1x16x16x128xf32>
    tpu.vector_store %arg9[%c0_40, %c0_41, %c0_42, %c0_43], %47 {strides = array<i32>} : memref<1x16x16x128xf32, #tpu.memory_space<vmem>>, vector<1x16x16x128xf32>,
    return
  }
  func.func @transform_0(%arg0: i32, %arg1: i32) -> (i32, i32, i32, i32) {
    %c0_i32 = arith.constant 0 : i32
    %c0_i32_0 = arith.constant 0 : i32
    %c0_i32_1 = arith.constant 0 : i32
    return %arg0, %arg1, %c0_i32, %c0_i32_0 : i32, i32, i32, i32
  }
  func.func @transform_1(%arg0: i32, %arg1: i32) -> (i32, i32, i32, i32) {
    %c16_i32 = arith.constant 16 : i32
    %0 = arith.muli %arg1, %c16_i32 : i32
    %c1_i32 = arith.constant 1 : i32
    %1 = arith.subi %0, %c1_i32 : i32
    %c0_i32 = arith.constant 0 : i32
    %2 = arith.maxsi %1, %c0_i32 : i32
    %c0_i32_0 = arith.constant 0 : i32
    %c0_i32_1 = arith.constant 0 : i32
    %c0_i32_2 = arith.constant 0 : i32
    return %arg0, %2, %c0_i32_0, %c0_i32_1 : i32, i32, i32, i32
  }
  func.func @transform_2(%arg0: i32, %arg1: i32) -> (i32, i32, i32, i32) {
    %c16_i32 = arith.constant 16 : i32
    %0 = arith.muli %arg1, %c16_i32 : i32
    %c16_i32_0 = arith.constant 16 : i32
    %1 = arith.addi %0, %c16_i32_0 : i32
    %c15_i32 = arith.constant 15 : i32
    %2 = arith.minsi %1, %c15_i32 : i32
    %c0_i32 = arith.constant 0 : i32
    %c0_i32_1 = arith.constant 0 : i32
    %c0_i32_2 = arith.constant 0 : i32
    return %arg0, %2, %c0_i32, %c0_i32_1 : i32, i32, i32, i32
  }
  func.func @transform_3(%arg0: i32, %arg1: i32) -> (i32, i32, i32) {
    %c0_i32 = arith.constant 0 : i32
    %c0_i32_0 = arith.constant 0 : i32
    %c0_i32_1 = arith.constant 0 : i32
    %c0_i32_2 = arith.constant 0 : i32
    return %c0_i32, %c0_i32_0, %c0_i32_1 : i32, i32, i32
  }
  func.func @transform_4(%arg0: i32, %arg1: i32) -> (i32, i32) {
    %c0_i32 = arith.constant 0 : i32
    %c0_i32_0 = arith.constant 0 : i32
    %c0_i32_1 = arith.constant 0 : i32
    return %c0_i32, %c0_i32_0 : i32, i32
  }
  func.func @transform_5(%arg0: i32, %arg1: i32) -> (i32, i32) {
    %c0_i32 = arith.constant 0 : i32
    %c0_i32_0 = arith.constant 0 : i32
    %c0_i32_1 = arith.constant 0 : i32
    return %c0_i32, %c0_i32_0 : i32, i32
  }
  func.func @transform_6(%arg0: i32, %arg1: i32) -> (i32, i32) {
    %c0_i32 = arith.constant 0 : i32
    %c0_i32_0 = arith.constant 0 : i32
    %c0_i32_1 = arith.constant 0 : i32
    return %c0_i32, %c0_i32_0 : i32, i32
  }
  func.func @transform_7(%arg0: i32, %arg1: i32) -> (i32, i32, i32, i32) {
    %c0_i32 = arith.constant 0 : i32
    %c0_i32_0 = arith.constant 0 : i32
    %c0_i32_1 = arith.constant 0 : i32
    return %arg0, %arg1, %c0_i32, %c0_i32_0 : i32, i32, i32, i32
  }
}

</mosaic_0001>

<llo_original>
// kernel: depthwise_separable_conv.1
$region0: #{depthwise_separable_conv.1}
  #allocation0 [shape = 'u32[]', space=smem, size = 0x4, offset = 0x4, fixed_abs, tag = 'smem constant byte address 0x4 - core index']
  #allocation1 [shape = 'u32[144,128]{1,0:T(1,128)}', space=vmem, size = 0x12000, scoped, tag = 'internal scratch']
  #allocation2 [shape = 'f32[18,24,128]{2,1,0:T(8,128)}', space=vmem, size = 0x36000, scoped, tag = 'scratch operand']
  #allocation3 [shape = 'bf16[16,16,128]{2,1,0:T(16,128)(2,1)}', space=vmem, size = 0x10000, scoped, tag = 'scratch operand']
  %s0 = inlined_call_operand.vmem [shape: f32[2,16,24,128], index: 0, kind: input, shape index: {}, may-alias: {0,1,2}]
  %s1 = inlined_call_operand.vmem [shape: f32[2,16,24,128], index: 1, kind: input, shape index: {}, may-alias: {0,1,2}]
  %s2 = inlined_call_operand.vmem [shape: f32[2,16,24,128], index: 2, kind: input, shape index: {}, may-alias: {0,1,2}]
  %s3 = inlined_call_operand.vmem [shape: f32[3,3,128], index: 3, kind: input, shape index: {}]
  %s4 = inlined_call_operand.vmem [shape: f32[1,128], index: 4, kind: input, shape index: {}]
  %s5 = inlined_call_operand.vmem [shape: bf16[128,128], index: 5, kind: input, shape index: {}]
  %s6 = inlined_call_operand.vmem [shape: f32[1,128], index: 6, kind: input, shape index: {}]
  %s7 = inlined_call_operand.vmem [shape: f32[2,16,16,128], index: 7, kind: output, shape index: {}]
  %s8 = sld [smem:[#allocation0]]
  $region68: #{depthwise_separable_conv.1} parent=0
    _
  %s10 = ssub.s32 1, %s8
  %s11 = scalar_select 0, %s10, %s8
  loop: start=0, step=1, limit=4
  $region2: #{depthwise_separable_conv.1} parent=0 // loop_pre_header
    _
  $region3: #{depthwise_separable_conv.1} parent=0 // loop_header
    %s13 = sphi 0, %s17
    %p14 = scmp.ge.s32.totalorder %s13, 4
    %s20 = sphi 0, %s32
    %s21 = sphi 0, %s28
    %s22 = sphi 0, %s20
    %s23 = sphi 0, %s21
    %s24 = sphi 0, %s22
    %s25 = sphi 0, %s23
    %s37 = sphi 0, %s39
    %s40 = sphi 0, %s37
    %s41 = sphi 0, %s40
    %s57 = sphi 0, %s41
    %s73 = sphi 0, %s75
    %s76 = sphi 0, %s73
    %s77 = sphi 0, %s76
    %s93 = sphi 0, %s77
    %s109 = sphi 0, %s111
    %s112 = sphi 0, %s109
    %s113 = sphi 0, %s112
    %s129 = sphi 0, %s113
    %s133 = sphi 0, %s133
    %s135 = sphi 0, %s133
    %s136 = sphi 0, %s135
    %s150 = sphi 0, %s136
    %s154 = sphi 0, %s154
    %s156 = sphi 0, %s154
    %s157 = sphi 0, %s156
    %s171 = sphi 0, %s157
    %s175 = sphi 0, %s175
    %s177 = sphi 0, %s175
    %s178 = sphi 0, %s177
    %s192 = sphi 0, %s178
    %s196 = sphi 0, %s196
    %s198 = sphi 0, %s196
    %s199 = sphi 0, %s198
    %s213 = sphi 0, %s199
    %s221 = sphi 0, %s223
    %s224 = sphi 0, %s221
    %s225 = sphi 0, %s224
    %s241 = sphi 0, %s225
  $region4: #{depthwise_separable_conv.1} parent=0 // loop_header_branch
    %16 = sbr.rel (%p14) target = $region8
  $region5: #{depthwise_separable_conv.1} parent=0 // loop_body
    %s18 = ssub.s32 %s13, 1
    %s19 = ssub.s32 %s13, 2
    %s26 = sadd.s32 1, %s21
    %p27 = scmp.ge.s32.totalorder %s26, 1
    %s28 = scalar_select %p27, 0, %s26
    %s29 = sadd.s32 1, %s20
    %s30 = scalar_select %p27, %s29, %s20
    %p31 = scmp.ge.s32.totalorder %s30, 2
    %s32 = scalar_select %p31, 0, %s30
    %s33 = ssub.s32 %s20, %s32
    %s34 = ssub.s32 %s21, %s28
    %s35 = sor.u32 %s33, %s34
    %p36 = scmp.eq.s32.totalorder %s35, 0
    %s38 = sadd.s32 %s37, 1
    %s39 = scalar_select %p36, %s37, %s38
    %p42 = pneg %p36
    %p43 = scmp.eq.s32.totalorder %s13, 1
    %p44 = por %p42, %p43
    %p45 = scmp.ne.s32.totalorder %s37, %s40
    %p46 = scmp.eq.s32.totalorder %s13, 0
    %p47 = por %p45, %p46
    %p48 = scmp.ne.s32.totalorder %s37, %s40
    %p49 = scmp.eq.s32.totalorder %s18, 1
    %p50 = por %p48, %p49
    %p51 = scmp.ne.s32.totalorder %s40, %s41
    %p52 = scmp.eq.s32.totalorder %s18, 0
    %p53 = por %p51, %p52
    %p54 = scmp.ne.s32.totalorder %s40, %s41
    %p55 = scmp.eq.s32.totalorder %s19, 1
    %p56 = por %p54, %p55
    %p58 = scmp.ne.s32.totalorder %s41, %s57
    %p59 = scmp.eq.s32.totalorder %s19, 0
    %p60 = por %p58, %p59
    %s61 = smul.u32 %s21, 16
    %s62 = ssub.s32 %s61, 1
    %p63 = scmp.gt.s32.totalorder %s62, 0
    %s64 = scalar_select %p63, %s62, 0
    %s65 = smul.u32 %s28, 16
    %s66 = ssub.s32 %s65, 1
    %p67 = scmp.gt.s32.totalorder %s66, 0
    %s68 = scalar_select %p67, %s66, 0
    %s69 = ssub.s32 %s20, %s32
    %s70 = ssub.s32 %s64, %s68
    %s71 = sor.u32 %s69, %s70
    %p72 = scmp.eq.s32.totalorder %s71, 0
    %s74 = sadd.s32 %s73, 1
    %s75 = scalar_select %p72, %s73, %s74
    %p78 = pneg %p72
    %p79 = scmp.eq.s32.totalorder %s13, 1
    %p80 = por %p78, %p79
    %p81 = scmp.ne.s32.totalorder %s73, %s76
    %p82 = scmp.eq.s32.totalorder %s13, 0
    %p83 = por %p81, %p82
    %p84 = scmp.ne.s32.totalorder %s73, %s76
    %p85 = scmp.eq.s32.totalorder %s18, 1
    %p86 = por %p84, %p85
    %p87 = scmp.ne.s32.totalorder %s76, %s77
    %p88 = scmp.eq.s32.totalorder %s18, 0
    %p89 = por %p87, %p88
    %p90 = scmp.ne.s32.totalorder %s76, %s77
    %p91 = scmp.eq.s32.totalorder %s19, 1
    %p92 = por %p90, %p91
    %p94 = scmp.ne.s32.totalorder %s77, %s93
    %p95 = scmp.eq.s32.totalorder %s19, 0
    %p96 = por %p94, %p95
    %s97 = smul.u32 %s21, 16
    %s98 = sadd.s32 %s97, 16
    %p99 = scmp.lt.s32.totalorder %s98, 15
    %s100 = scalar_select %p99, %s98, 15
    %s101 = smul.u32 %s28, 16
    %s102 = sadd.s32 %s101, 16
    %p103 = scmp.lt.s32.totalorder %s102, 15
    %s104 = scalar_select %p103, %s102, 15
    %s105 = ssub.s32 %s20, %s32
    %s106 = ssub.s32 %s100, %s104
    %s107 = sor.u32 %s105, %s106
    %p108 = scmp.eq.s32.totalorder %s107, 0
    %s110 = sadd.s32 %s109, 1
    %s111 = scalar_select %p108, %s109, %s110
    %p114 = pneg %p108
    %p115 = scmp.eq.s32.totalorder %s13, 1
    %p116 = por %p114, %p115
    %p117 = scmp.ne.s32.totalorder %s109, %s112
    %p118 = scmp.eq.s32.totalorder %s13, 0
    %p119 = por %p117, %p118
    %p120 = scmp.ne.s32.totalorder %s109, %s112
    %p121 = scmp.eq.s32.totalorder %s18, 1
    %p122 = por %p120, %p121
    %p123 = scmp.ne.s32.totalorder %s112, %s113
    %p124 = scmp.eq.s32.totalorder %s18, 0
    %p125 = por %p123, %p124
    %p126 = scmp.ne.s32.totalorder %s112, %s113
    %p127 = scmp.eq.s32.totalorder %s19, 1
    %p128 = por %p126, %p127
    %p130 = scmp.ne.s32.totalorder %s113, %s129
    %p131 = scmp.eq.s32.totalorder %s19, 0
    %p132 = por %p130, %p131
    %s134 = sadd.s32 %s133, 1
    %p137 = scmp.eq.s32.totalorder %s13, 1
    %p138 = scmp.ne.s32.totalorder %s133, %s135
    %p139 = scmp.eq.s32.totalorder %s13, 0
    %p140 = por %p138, %p139
    %p141 = scmp.ne.s32.totalorder %s133, %s135
    %p142 = scmp.eq.s32.totalorder %s18, 1
    %p143 = por %p141, %p142
    %p144 = scmp.ne.s32.totalorder %s135, %s136
    %p145 = scmp.eq.s32.totalorder %s18, 0
    %p146 = por %p144, %p145
    %p147 = scmp.ne.s32.totalorder %s135, %s136
    %p148 = scmp.eq.s32.totalorder %s19, 1
    %p149 = por %p147, %p148
    %p151 = scmp.ne.s32.totalorder %s136, %s150
    %p152 = scmp.eq.s32.totalorder %s19, 0
    %p153 = por %p151, %p152
    %s155 = sadd.s32 %s154, 1
    %p158 = scmp.eq.s32.totalorder %s13, 1
    %p159 = scmp.ne.s32.totalorder %s154, %s156
    %p160 = scmp.eq.s32.totalorder %s13, 0
    %p161 = por %p159, %p160
    %p162 = scmp.ne.s32.totalorder %s154, %s156
    %p163 = scmp.eq.s32.totalorder %s18, 1
    %p164 = por %p162, %p163
    %p165 = scmp.ne.s32.totalorder %s156, %s157
    %p166 = scmp.eq.s32.totalorder %s18, 0
    %p167 = por %p165, %p166
    %p168 = scmp.ne.s32.totalorder %s156, %s157
    %p169 = scmp.eq.s32.totalorder %s19, 1
    %p170 = por %p168, %p169
    %p172 = scmp.ne.s32.totalorder %s157, %s171
    %p173 = scmp.eq.s32.totalorder %s19, 0
    %p174 = por %p172, %p173
    %s176 = sadd.s32 %s175, 1
    %p179 = scmp.eq.s32.totalorder %s13, 1
    %p180 = scmp.ne.s32.totalorder %s175, %s177
    %p181 = scmp.eq.s32.totalorder %s13, 0
    %p182 = por %p180, %p181
    %p183 = scmp.ne.s32.totalorder %s175, %s177
    %p184 = scmp.eq.s32.totalorder %s18, 1
    %p185 = por %p183, %p184
    %p186 = scmp.ne.s32.totalorder %s177, %s178
    %p187 = scmp.eq.s32.totalorder %s18, 0
    %p188 = por %p186, %p187
    %p189 = scmp.ne.s32.totalorder %s177, %s178
    %p190 = scmp.eq.s32.totalorder %s19, 1
    %p191 = por %p189, %p190
    %p193 = scmp.ne.s32.totalorder %s178, %s192
    %p194 = scmp.eq.s32.totalorder %s19, 0
    %p195 = por %p193, %p194
    %s197 = sadd.s32 %s196, 1
    %p200 = scmp.eq.s32.totalorder %s13, 1
    %p201 = scmp.ne.s32.totalorder %s196, %s198
    %p202 = scmp.eq.s32.totalorder %s13, 0
    %p203 = por %p201, %p202
    %p204 = scmp.ne.s32.totalorder %s196, %s198
    %p205 = scmp.eq.s32.totalorder %s18, 1
    %p206 = por %p204, %p205
    %p207 = scmp.ne.s32.totalorder %s198, %s199
    %p208 = scmp.eq.s32.totalorder %s18, 0
    %p209 = por %p207, %p208
    %p210 = scmp.ne.s32.totalorder %s198, %s199
    %p211 = scmp.eq.s32.totalorder %s19, 1
    %p212 = por %p210, %p211
    %p214 = scmp.ne.s32.totalorder %s199, %s213
    %p215 = scmp.eq.s32.totalorder %s19, 0
    %p216 = por %p214, %p215
    %s217 = ssub.s32 %s20, %s32
    %s218 = ssub.s32 %s21, %s28
    %s219 = sor.u32 %s217, %s218
    %p220 = scmp.eq.s32.totalorder %s219, 0
    %s222 = sadd.s32 %s221, 1
    %s223 = scalar_select %p220, %s221, %s222
    %p226 = pneg %p220
    %p227 = scmp.eq.s32.totalorder %s13, 1
    %p228 = por %p226, %p227
    %p229 = scmp.ne.s32.totalorder %s221, %s224
    %p230 = scmp.eq.s32.totalorder %s13, 0
    %p231 = por %p229, %p230
    %p232 = scmp.ne.s32.totalorder %s221, %s224
    %p233 = scmp.eq.s32.totalorder %s18, 1
    %p234 = por %p232, %p233
    %p235 = scmp.ne.s32.totalorder %s224, %s225
    %p236 = scmp.eq.s32.totalorder %s18, 0
    %p237 = por %p235, %p236
    %p238 = scmp.ne.s32.totalorder %s224, %s225
    %p239 = scmp.eq.s32.totalorder %s19, 1
    %p240 = por %p238, %p239
    %p242 = scmp.ne.s32.totalorder %s225, %s241
    %p243 = scmp.eq.s32.totalorder %s19, 0
    %p244 = por %p242, %p243
    %p245 = scmp.le.s32.totalorder 1, %s13
    %p246 = scmp.lt.s32.totalorder %s13, 3
    %p247 = pnand %p245, %p246
    %p248 = pneg %p247
    // Predicated region
    $region9: #{depthwise_separable_conv.1} parent=5 // pred_check
      _
    $region10: #{depthwise_separable_conv.1} parent=5 // pred_check_branch
      %250 = sbr.rel (%p247) target = $region12
    $region11: #{depthwise_separable_conv.1} parent=5 // pred_region
      %s251 = ssub.s32 %s13, 1
      // Predicated region
      $region13: #{depthwise_separable_conv.1} parent=11 // pred_check
        %p252 = pneg %p146
      $region14: #{depthwise_separable_conv.1} parent=11 // pred_check_branch
        %254 = sbr.rel (%p252) target = $region16
      $region15: #{depthwise_separable_conv.1} parent=11 // pred_region
        _
      $region16: #{depthwise_separable_conv.1} parent=11 // pred_fallthru
        _
      // Predicated region
      $region17: #{depthwise_separable_conv.1} parent=11 // pred_check
        %p255 = pneg %p167
      $region18: #{depthwise_separable_conv.1} parent=11 // pred_check_branch
        %257 = sbr.rel (%p255) target = $region20
      $region19: #{depthwise_separable_conv.1} parent=11 // pred_region
        _
      $region20: #{depthwise_separable_conv.1} parent=11 // pred_fallthru
        _
      // Predicated region
      $region21: #{depthwise_separable_conv.1} parent=11 // pred_check
        %p258 = pneg %p188
      $region22: #{depthwise_separable_conv.1} parent=11 // pred_check_branch
        %260 = sbr.rel (%p258) target = $region24
      $region23: #{depthwise_separable_conv.1} parent=11 // pred_region
        _
      $region24: #{depthwise_separable_conv.1} parent=11 // pred_fallthru
        _
      // Predicated region
      $region25: #{depthwise_separable_conv.1} parent=11 // pred_check
        %p261 = pneg %p209
      $region26: #{depthwise_separable_conv.1} parent=11 // pred_check_branch
        %263 = sbr.rel (%p261) target = $region28
      $region27: #{depthwise_separable_conv.1} parent=11 // pred_region
        _
      $region28: #{depthwise_separable_conv.1} parent=11 // pred_fallthru
        _
    $region12: #{depthwise_separable_conv.1} parent=5 // pred_fallthru
      _
    %p264 = scmp.lt.s32.totalorder %s13, 2
    // Predicated region
    $region29: #{depthwise_separable_conv.1} parent=5 // pred_check
      %p265 = pneg %p264
    $region30: #{depthwise_separable_conv.1} parent=5 // pred_check_branch
      %267 = sbr.rel (%p265) target = $region32
    $region31: #{depthwise_separable_conv.1} parent=5 // pred_region
      // Predicated region
      $region33: #{depthwise_separable_conv.1} parent=31 // pred_check
        %p268 = pneg %p47
      $region34: #{depthwise_separable_conv.1} parent=31 // pred_check_branch
        %270 = sbr.rel (%p268) target = $region36
      $region35: #{depthwise_separable_conv.1} parent=31 // pred_region
        %s271 = smul.u32 16, %s21
        %p272 = scmp.lt.s32.totalorder %s20, 1
        %s273 = scalar_select %p272, %s20, 1
        %p274 = scmp.lt.s32.totalorder %s271, 15
        %s275 = scalar_select %p274, %s271, 15
        %s276 = smul.addr %s275, 3
        %s277 = smul.addr %s273, 48
        %s278 = sadd.s32 %s276, %s277
        %s279 = smul.addr %s278, 8
        %s280 = scalar_lea.vmem %s0, %s279
        %s281 = smul.u32 16, %s21
      $region36: #{depthwise_separable_conv.1} parent=31 // pred_fallthru
        _
      // Predicated region
      $region37: #{depthwise_separable_conv.1} parent=31 // pred_check
        %p282 = pneg %p83
      $region38: #{depthwise_separable_conv.1} parent=31 // pred_check_branch
        %284 = sbr.rel (%p282) target = $region40
      $region39: #{depthwise_separable_conv.1} parent=31 // pred_region
        %s285 = smul.u32 %s21, 16
        %s286 = ssub.s32 %s285, 1
        %p287 = scmp.gt.s32.totalorder %s286, 0
        %s288 = scalar_select %p287, %s286, 0
        %p289 = scmp.lt.s32.totalorder %s20, 1
        %s290 = scalar_select %p289, %s20, 1
        %p291 = scmp.lt.s32.totalorder %s288, 15
        %s292 = scalar_select %p291, %s288, 15
        %s293 = smul.addr %s292, 3
        %s294 = smul.addr %s290, 48
        %s295 = sadd.s32 %s293, %s294
        %s296 = smul.addr %s295, 8
        %s297 = scalar_lea.vmem %s1, %s296
        %s298 = smul.u32 %s21, 16
        %s299 = ssub.s32 %s298, 1
        %p300 = scmp.gt.s32.totalorder %s299, 0
        %s301 = scalar_select %p300, %s299, 0
      $region40: #{depthwise_separable_conv.1} parent=31 // pred_fallthru
        _
      // Predicated region
      $region41: #{depthwise_separable_conv.1} parent=31 // pred_check
        %p302 = pneg %p119
      $region42: #{depthwise_separable_conv.1} parent=31 // pred_check_branch
        %304 = sbr.rel (%p302) target = $region44
      $region43: #{depthwise_separable_conv.1} parent=31 // pred_region
        %s305 = smul.u32 %s21, 16
        %s306 = sadd.s32 %s305, 16
        %p307 = scmp.lt.s32.totalorder %s306, 15
        %s308 = scalar_select %p307, %s306, 15
        %p309 = scmp.lt.s32.totalorder %s20, 1
        %s310 = scalar_select %p309, %s20, 1
        %p311 = scmp.lt.s32.totalorder %s308, 15
        %s312 = scalar_select %p311, %s308, 15
        %s313 = smul.addr %s312, 3
        %s314 = smul.addr %s310, 48
        %s315 = sadd.s32 %s313, %s314
        %s316 = smul.addr %s315, 8
        %s317 = scalar_lea.vmem %s2, %s316
        %s318 = smul.u32 %s21, 16
        %s319 = sadd.s32 %s318, 16
        %p320 = scmp.lt.s32.totalorder %s319, 15
        %s321 = scalar_select %p320, %s319, 15
      $region44: #{depthwise_separable_conv.1} parent=31 // pred_fallthru
        _
    $region32: #{depthwise_separable_conv.1} parent=5 // pred_fallthru
      _
    %p322 = scmp.le.s32.totalorder 1, %s13
    %p323 = scmp.lt.s32.totalorder %s13, 3
    %p324 = pnand %p322, %p323
    %p325 = pneg %p324
    // Predicated region
    $region45: #{depthwise_separable_conv.1} parent=5 // pred_check
      _
    $region46: #{depthwise_separable_conv.1} parent=5 // pred_check_branch
      %327 = sbr.rel (%p324) target = $region48
    $region47: #{depthwise_separable_conv.1} parent=5 // pred_region
      %s328 = ssub.s32 %s13, 1
      %s329 = smul.u32 16, %s23
      %p330 = scmp.lt.s32.totalorder %s22, 1
      %s331 = scalar_select %p330, %s22, 1
      %p332 = scmp.lt.s32.totalorder %s329, 15
      %s333 = scalar_select %p332, %s329, 15
      %s334 = smul.addr %s333, 3
      %s335 = smul.addr %s331, 48
      %s336 = sadd.s32 %s334, %s335
      %s337 = smul.addr %s336, 8
      %s338 = scalar_lea.vmem %s0, %s337
      %p339 = pneg %p53
      %p340 = pneg %p50
      %s341 = smul.u32 %s23, 16
      %s342 = ssub.s32 %s341, 1
      %p343 = scmp.gt.s32.totalorder %s342, 0
      %s344 = scalar_select %p343, %s342, 0
      %p345 = scmp.lt.s32.totalorder %s22, 1
      %s346 = scalar_select %p345, %s22, 1
      %p347 = scmp.lt.s32.totalorder %s344, 15
      %s348 = scalar_select %p347, %s344, 15
      %s349 = smul.addr %s348, 3
      %s350 = smul.addr %s346, 48
      %s351 = sadd.s32 %s349, %s350
      %s352 = smul.addr %s351, 8
      %s353 = scalar_lea.vmem %s1, %s352
      %p354 = pneg %p89
      %p355 = pneg %p86
      %s356 = smul.u32 %s23, 16
      %s357 = sadd.s32 %s356, 16
      %p358 = scmp.lt.s32.totalorder %s357, 15
      %s359 = scalar_select %p358, %s357, 15
      %p360 = scmp.lt.s32.totalorder %s22, 1
      %s361 = scalar_select %p360, %s22, 1
      %p362 = scmp.lt.s32.totalorder %s359, 15
      %s363 = scalar_select %p362, %s359, 15
      %s364 = smul.addr %s363, 3
      %s365 = smul.addr %s361, 48
      %s366 = sadd.s32 %s364, %s365
      %s367 = smul.addr %s366, 8
      %s368 = scalar_lea.vmem %s2, %s367
      %p369 = pneg %p125
      %p370 = pneg %p122
      %p371 = pneg %p146
      %p372 = pneg %p143
      %p373 = pneg %p167
      %p374 = pneg %p164
      %p375 = pneg %p188
      %p376 = pneg %p185
      %p377 = pneg %p209
      %p378 = pneg %p206
      %p379 = pneg %p237
      %p380 = pneg %p234
      %s381 = smul.u32 16, %s23
      %p382 = scmp.lt.s32.totalorder %s22, 1
      %s383 = scalar_select %p382, %s22, 1
      %p384 = scmp.lt.s32.totalorder %s381, 15
      %s385 = scalar_select %p384, %s381, 15
      %s386 = smul.addr %s385, 2
      %s387 = smul.addr %s383, 32
      %s388 = sadd.s32 %s386, %s387
      %s389 = smul.addr %s388, 8
      %s390 = scalar_lea.vmem %s7, %s389
      %s391 = smul.u32 16, %s23
      %p392 = scmp.lt.s32.totalorder %s22, 1
      %s393 = scalar_select %p392, %s22, 1
      %p394 = scmp.lt.s32.totalorder %s391, 15
      %s395 = scalar_select %p394, %s391, 15
      %s396 = smul.addr %s395, 3
      %s397 = smul.addr %s393, 48
      %s398 = sadd.s32 %s396, %s397
      %s399 = smul.addr %s398, 8
      %s400 = scalar_lea.vmem %s0, %s399
      %s401 = smul.u32 16, %s23
      %s402 = smul.u32 %s23, 16
      %s403 = ssub.s32 %s402, 1
      %p404 = scmp.gt.s32.totalorder %s403, 0
      %s405 = scalar_select %p404, %s403, 0
      %p406 = scmp.lt.s32.totalorder %s22, 1
      %s407 = scalar_select %p406, %s22, 1
      %p408 = scmp.lt.s32.totalorder %s405, 15
      %s409 = scalar_select %p408, %s405, 15
      %s410 = smul.addr %s409, 3
      %s411 = smul.addr %s407, 48
      %s412 = sadd.s32 %s410, %s411
      %s413 = smul.addr %s412, 8
      %s414 = scalar_lea.vmem %s1, %s413
      %s415 = smul.u32 %s23, 16
      %s416 = ssub.s32 %s415, 1
      %p417 = scmp.gt.s32.totalorder %s416, 0
      %s418 = scalar_select %p417, %s416, 0
      %s419 = smul.u32 %s23, 16
      %s420 = sadd.s32 %s419, 16
      %p421 = scmp.lt.s32.totalorder %s420, 15
      %s422 = scalar_select %p421, %s420, 15
      %p423 = scmp.lt.s32.totalorder %s22, 1
      %s424 = scalar_select %p423, %s22, 1
      %p425 = scmp.lt.s32.totalorder %s422, 15
      %s426 = scalar_select %p425, %s422, 15
      %s427 = smul.addr %s426, 3
      %s428 = smul.addr %s424, 48
      %s429 = sadd.s32 %s427, %s428
      %s430 = smul.addr %s429, 8
      %s431 = scalar_lea.vmem %s2, %s430
      %s432 = smul.u32 %s23, 16
      %s433 = sadd.s32 %s432, 16
      %p434 = scmp.lt.s32.totalorder %s433, 15
      %s435 = scalar_select %p434, %s433, 15
      %s436 = smul.u32 16, %s23
      %p437 = scmp.lt.s32.totalorder %s22, 1
      %s438 = scalar_select %p437, %s22, 1
      %p439 = scmp.lt.s32.totalorder %s436, 15
      %s440 = scalar_select %p439, %s436, 15
      %s441 = smul.addr %s440, 2
      %s442 = smul.addr %s438, 32
      %s443 = sadd.s32 %s441, %s442
      %s444 = smul.addr %s443, 8
      %s445 = scalar_lea.vmem %s7, %s444
      %s446 = smul.u32 16, %s23
      %v448 = vld [vmem:[%s400] sm:$0xff]
      %v449 = vld [vmem:[%s400 + $0x8] sm:$0xff]
      %v450 = vld [vmem:[%s400 + $0x10] sm:$0xff]
      %v451 = vld [vmem:[%s400 + $0x18] sm:$0xff]
      %v452 = vld [vmem:[%s400 + $0x20] sm:$0xff]
      %v453 = vld [vmem:[%s400 + $0x28] sm:$0xff]
      %v454 = vld [vmem:[%s400 + $0x30] sm:$0xff]
      %v455 = vld [vmem:[%s400 + $0x38] sm:$0xff]
      %v456 = vld [vmem:[%s400 + $0x40] sm:$0xff]
      %v457 = vld [vmem:[%s400 + $0x48] sm:$0xff]
      %v458 = vld [vmem:[%s400 + $0x50] sm:$0xff]
      %v459 = vld [vmem:[%s400 + $0x58] sm:$0xff]
      %v460 = vld [vmem:[%s400 + $0x60] sm:$0xff]
      %v461 = vld [vmem:[%s400 + $0x68] sm:$0xff]
      %v462 = vld [vmem:[%s400 + $0x70] sm:$0xff]
      %v463 = vld [vmem:[%s400 + $0x78] sm:$0xff]
      %v464 = vld [vmem:[%s400 + $0x80] sm:$0xff]
      %v465 = vld [vmem:[%s400 + $0x88] sm:$0xff]
      %v466 = vld [vmem:[%s400 + $0x90] sm:$0xff]
      %v467 = vld [vmem:[%s400 + $0x98] sm:$0xff]
      %v468 = vld [vmem:[%s400 + $0xa0] sm:$0xff]
      %v469 = vld [vmem:[%s400 + $0xa8] sm:$0xff]
      %v470 = vld [vmem:[%s400 + $0xb0] sm:$0xff]
      %v471 = vld [vmem:[%s400 + $0xb8] sm:$0xff]
      %v472 = vld [vmem:[%s400 + $0xc0] sm:$0xff]
      %v473 = vld [vmem:[%s400 + $0xc8] sm:$0xff]
      %v474 = vld [vmem:[%s400 + $0xd0] sm:$0xff]
      %v475 = vld [vmem:[%s400 + $0xd8] sm:$0xff]
      %v476 = vld [vmem:[%s400 + $0xe0] sm:$0xff]
      %v477 = vld [vmem:[%s400 + $0xe8] sm:$0xff]
      %v478 = vld [vmem:[%s400 + $0xf0] sm:$0xff]
      %v479 = vld [vmem:[%s400 + $0xf8] sm:$0xff]
      %v480 = vld [vmem:[%s400 + $0x100] sm:$0xff]
      %v481 = vld [vmem:[%s400 + $0x108] sm:$0xff]
      %v482 = vld [vmem:[%s400 + $0x110] sm:$0xff]
      %v483 = vld [vmem:[%s400 + $0x118] sm:$0xff]
      %v484 = vld [vmem:[%s400 + $0x120] sm:$0xff]
      %v485 = vld [vmem:[%s400 + $0x128] sm:$0xff]
      %v486 = vld [vmem:[%s400 + $0x130] sm:$0xff]
      %v487 = vld [vmem:[%s400 + $0x138] sm:$0xff]
      %v488 = vld [vmem:[%s400 + $0x140] sm:$0xff]
      %v489 = vld [vmem:[%s400 + $0x148] sm:$0xff]
      %v490 = vld [vmem:[%s400 + $0x150] sm:$0xff]
      %v491 = vld [vmem:[%s400 + $0x158] sm:$0xff]
      %v492 = vld [vmem:[%s400 + $0x160] sm:$0xff]
      %v493 = vld [vmem:[%s400 + $0x168] sm:$0xff]
      %v494 = vld [vmem:[%s400 + $0x170] sm:$0xff]
      %v495 = vld [vmem:[%s400 + $0x178] sm:$0xff]
      %s496 = scalar_lea.vmem [#allocation2], 24
      %497 = vst [vmem:[%s496] sm:$0xff] %v448
      %498 = vst [vmem:[%s496 + $0x8] sm:$0xff] %v449
      %499 = vst [vmem:[%s496 + $0x10] sm:$0xff] %v450
      %500 = vst [vmem:[%s496 + $0x18] sm:$0xff] %v451
      %501 = vst [vmem:[%s496 + $0x20] sm:$0xff] %v452
      %502 = vst [vmem:[%s496 + $0x28] sm:$0xff] %v453
      %503 = vst [vmem:[%s496 + $0x30] sm:$0xff] %v454
      %504 = vst [vmem:[%s496 + $0x38] sm:$0xff] %v455
      %505 = vst [vmem:[%s496 + $0x40] sm:$0xff] %v456
      %506 = vst [vmem:[%s496 + $0x48] sm:$0xff] %v457
      %507 = vst [vmem:[%s496 + $0x50] sm:$0xff] %v458
      %508 = vst [vmem:[%s496 + $0x58] sm:$0xff] %v459
      %509 = vst [vmem:[%s496 + $0x60] sm:$0xff] %v460
      %510 = vst [vmem:[%s496 + $0x68] sm:$0xff] %v461
      %511 = vst [vmem:[%s496 + $0x70] sm:$0xff] %v462
      %512 = vst [vmem:[%s496 + $0x78] sm:$0xff] %v463
      %513 = vst [vmem:[%s496 + $0x80] sm:$0xff] %v464
      %514 = vst [vmem:[%s496 + $0x88] sm:$0xff] %v465
      %515 = vst [vmem:[%s496 + $0x90] sm:$0xff] %v466
      %516 = vst [vmem:[%s496 + $0x98] sm:$0xff] %v467
      %517 = vst [vmem:[%s496 + $0xa0] sm:$0xff] %v468
      %518 = vst [vmem:[%s496 + $0xa8] sm:$0xff] %v469
      %519 = vst [vmem:[%s496 + $0xb0] sm:$0xff] %v470
      %520 = vst [vmem:[%s496 + $0xb8] sm:$0xff] %v471
      %521 = vst [vmem:[%s496 + $0xc0] sm:$0xff] %v472
      %522 = vst [vmem:[%s496 + $0xc8] sm:$0xff] %v473
      %523 = vst [vmem:[%s496 + $0xd0] sm:$0xff] %v474
      %524 = vst [vmem:[%s496 + $0xd8] sm:$0xff] %v475
      %525 = vst [vmem:[%s496 + $0xe0] sm:$0xff] %v476
      %526 = vst [vmem:[%s496 + $0xe8] sm:$0xff] %v477
      %527 = vst [vmem:[%s496 + $0xf0] sm:$0xff] %v478
      %528 = vst [vmem:[%s496 + $0xf8] sm:$0xff] %v479
      %529 = vst [vmem:[%s496 + $0x100] sm:$0xff] %v480
      %530 = vst [vmem:[%s496 + $0x108] sm:$0xff] %v481
      %531 = vst [vmem:[%s496 + $0x110] sm:$0xff] %v482
      %532 = vst [vmem:[%s496 + $0x118] sm:$0xff] %v483
      %533 = vst [vmem:[%s496 + $0x120] sm:$0xff] %v484
      %534 = vst [vmem:[%s496 + $0x128] sm:$0xff] %v485
      %535 = vst [vmem:[%s496 + $0x130] sm:$0xff] %v486
      %536 = vst [vmem:[%s496 + $0x138] sm:$0xff] %v487
      %537 = vst [vmem:[%s496 + $0x140] sm:$0xff] %v488
      %538 = vst [vmem:[%s496 + $0x148] sm:$0xff] %v489
      %539 = vst [vmem:[%s496 + $0x150] sm:$0xff] %v490
      %540 = vst [vmem:[%s496 + $0x158] sm:$0xff] %v491
      %541 = vst [vmem:[%s496 + $0x160] sm:$0xff] %v492
      %542 = vst [vmem:[%s496 + $0x168] sm:$0xff] %v493
      %543 = vst [vmem:[%s496 + $0x170] sm:$0xff] %v494
      %544 = vst [vmem:[%s496 + $0x178] sm:$0xff] %v495
      %p545 = scmp.gt.s32.totalorder %s23, 0
      %v546 = vld [vmem:[%s414] sm:$0xff]
      %v547 = vld [vmem:[%s414 + $0x8] sm:$0xff]
      %v548 = vld [vmem:[%s414 + $0x10] sm:$0xff]
      %s549 = scalar_select %p545, 1, 0
      %v550 = vstv %s549
      %vm551 = vcmp.eq.s32.totalorder %v550, 1
      %v552 = vsel %vm551, %v546, 0.0
      %v553 = vsel %vm551, %v547, 0.0
      %v554 = vsel %vm551, %v548, 0.0
      %555 = vst [vmem:[#allocation2] sm:$0xff] %v552
      %556 = vst [vmem:[#allocation2 + $0x8] sm:$0xff] %v553
      %557 = vst [vmem:[#allocation2 + $0x10] sm:$0xff] %v554
      %p558 = scmp.lt.s32.totalorder %s23, 0
      %v559 = vld [vmem:[%s431] sm:$0xff]
      %v560 = vld [vmem:[%s431 + $0x8] sm:$0xff]
      %v561 = vld [vmem:[%s431 + $0x10] sm:$0xff]
      %s562 = scalar_select %p558, 1, 0
      %v563 = vstv %s562
      %vm564 = vcmp.eq.s32.totalorder %v563, 1
      %v565 = vsel %vm564, %v559, 0.0
      %v566 = vsel %vm564, %v560, 0.0
      %v567 = vsel %vm564, %v561, 0.0
      %s568 = scalar_lea.vmem [#allocation2], 408
      %569 = vst [vmem:[%s568] sm:$0xff] %v565
      %570 = vst [vmem:[%s568 + $0x8] sm:$0xff] %v566
      %571 = vst [vmem:[%s568 + $0x10] sm:$0xff] %v567
      %v572 = vld [vmem:[%s3] sm:$0x7]
      %v573 = vld [vmem:[%s3 + $0x4] sm:$0x7]
      %v574 = vld [vmem:[%s3 + $0x8] sm:$0x7]
      %v575 = vld [vmem:[%s4] sm:$0x1]
      loop: start=0, step=1, limit=2
      $region49: #{depthwise_separable_conv.1} parent=47 // loop_pre_header
        _
      $region50: #{depthwise_separable_conv.1} parent=47 // loop_header
        %s577 = sphi 0, %s581
        %p578 = scmp.ge.s32.totalorder %s577, 2
      $region51: #{depthwise_separable_conv.1} parent=47 // loop_header_branch
        %580 = sbr.rel (%p578) target = $region55
      $region52: #{depthwise_separable_conv.1} parent=47 // loop_body
        %s582 = smul.u32 %s577, 8
        %p583 = scmp.lt.s32.totalorder %s582, 8
        %s584 = scalar_select %p583, %s582, 8
        %s585 = smul.u32 %s584, 24
        %s586 = scalar_lea.vmem [#allocation2], %s585
        %v587 = vld [vmem:[%s586] sm:$0xff]
        %v588 = vld [vmem:[%s586 + $0x8] sm:$0xff]
        %v589 = vld [vmem:[%s586 + $0x18] sm:$0xff]
        %v590 = vld [vmem:[%s586 + $0x20] sm:$0xff]
        %v591 = vld [vmem:[%s586 + $0x30] sm:$0xff]
        %v592 = vld [vmem:[%s586 + $0x38] sm:$0xff]
        %v593 = vld [vmem:[%s586 + $0x48] sm:$0xff]
        %v594 = vld [vmem:[%s586 + $0x50] sm:$0xff]
        %v595 = vld [vmem:[%s586 + $0x60] sm:$0xff]
        %v596 = vld [vmem:[%s586 + $0x68] sm:$0xff]
        %v597 = vld [vmem:[%s586 + $0x78] sm:$0xff]
        %v598 = vld [vmem:[%s586 + $0x80] sm:$0xff]
        %v599 = vld [vmem:[%s586 + $0x90] sm:$0xff]
        %v600 = vld [vmem:[%s586 + $0x98] sm:$0xff]
        %v601 = vld [vmem:[%s586 + $0xa8] sm:$0xff]
        %v602 = vld [vmem:[%s586 + $0xb0] sm:$0xff]
        %v603 = vlaneseq
        %v604 = vshrl.u32 %v603, 7
        %v605 = vsub.s32 0, %v604
        %v606 = vrot.slane %v572, %v605
        %v607 = vmul.f32 %v587, %v606
        %v608 = vmul.f32 %v588, %v606
        %v609 = vmul.f32 %v589, %v606
        %v610 = vmul.f32 %v590, %v606
        %v611 = vmul.f32 %v591, %v606
        %v612 = vmul.f32 %v592, %v606
        %v613 = vmul.f32 %v593, %v606
        %v614 = vmul.f32 %v594, %v606
        %v615 = vmul.f32 %v595, %v606
        %v616 = vmul.f32 %v596, %v606
        %v617 = vmul.f32 %v597, %v606
        %v618 = vmul.f32 %v598, %v606
        %v619 = vmul.f32 %v599, %v606
        %v620 = vmul.f32 %v600, %v606
        %v621 = vmul.f32 %v601, %v606
        %v622 = vmul.f32 %v602, %v606
        %v624 = vlaneseq
        %v625 = vshrl.u32 %v624, 7
        %v626 = vsub.s32 0, %v625
        %v627 = vrot.slane %v575, %v626
        %v629 = vadd.f32 %v607, %v627
        %v630 = vadd.f32 %v608, %v627
        %v631 = vadd.f32 %v609, %v627
        %v632 = vadd.f32 %v610, %v627
        %v633 = vadd.f32 %v611, %v627
        %v634 = vadd.f32 %v612, %v627
        %v635 = vadd.f32 %v613, %v627
        %v636 = vadd.f32 %v614, %v627
        %v637 = vadd.f32 %v615, %v627
        %v638 = vadd.f32 %v616, %v627
        %v639 = vadd.f32 %v617, %v627
        %v640 = vadd.f32 %v618, %v627
        %v641 = vadd.f32 %v619, %v627
        %v642 = vadd.f32 %v620, %v627
        %v643 = vadd.f32 %v621, %v627
        %v644 = vadd.f32 %v622, %v627
        %v645 = vld [vmem:[%s586 + $0x1] sm:$0xff]
        %v646 = vld [vmem:[%s586 + $0x9] sm:$0xff]
        %v647 = vld [vmem:[%s586 + $0x19] sm:$0xff]
        %v648 = vld [vmem:[%s586 + $0x21] sm:$0xff]
        %v649 = vld [vmem:[%s586 + $0x31] sm:$0xff]
        %v650 = vld [vmem:[%s586 + $0x39] sm:$0xff]
        %v651 = vld [vmem:[%s586 + $0x49] sm:$0xff]
        %v652 = vld [vmem:[%s586 + $0x51] sm:$0xff]
        %v653 = vld [vmem:[%s586 + $0x61] sm:$0xff]
        %v654 = vld [vmem:[%s586 + $0x69] sm:$0xff]
        %v655 = vld [vmem:[%s586 + $0x79] sm:$0xff]
        %v656 = vld [vmem:[%s586 + $0x81] sm:$0xff]
        %v657 = vld [vmem:[%s586 + $0x91] sm:$0xff]
        %v658 = vld [vmem:[%s586 + $0x99] sm:$0xff]
        %v659 = vld [vmem:[%s586 + $0xa9] sm:$0xff]
        %v660 = vld [vmem:[%s586 + $0xb1] sm:$0xff]
        %v661 = vlaneseq
        %v662 = vshrl.u32 %v661, 7
        %v663 = vsub.s32 1, %v662
        %v664 = vrot.slane %v572, %v663
        %v665 = vmul.f32 %v645, %v664
        %v666 = vmul.f32 %v646, %v664
        %v667 = vmul.f32 %v647, %v664
        %v668 = vmul.f32 %v648, %v664
        %v669 = vmul.f32 %v649, %v664
        %v670 = vmul.f32 %v650, %v664
        %v671 = vmul.f32 %v651, %v664
        %v672 = vmul.f32 %v652, %v664
        %v673 = vmul.f32 %v653, %v664
        %v674 = vmul.f32 %v654, %v664
        %v675 = vmul.f32 %v655, %v664
        %v676 = vmul.f32 %v656, %v664
        %v677 = vmul.f32 %v657, %v664
        %v678 = vmul.f32 %v658, %v664
        %v679 = vmul.f32 %v659, %v664
        %v680 = vmul.f32 %v660, %v664
        %v681 = vadd.f32 %v629, %v665
        %v682 = vadd.f32 %v630, %v666
        %v683 = vadd.f32 %v631, %v667
        %v684 = vadd.f32 %v632, %v668
        %v685 = vadd.f32 %v633, %v669
        %v686 = vadd.f32 %v634, %v670
        %v687 = vadd.f32 %v635, %v671
        %v688 = vadd.f32 %v636, %v672
        %v689 = vadd.f32 %v637, %v673
        %v690 = vadd.f32 %v638, %v674
        %v691 = vadd.f32 %v639, %v675
        %v692 = vadd.f32 %v640, %v676
        %v693 = vadd.f32 %v641, %v677
        %v694 = vadd.f32 %v642, %v678
        %v695 = vadd.f32 %v643, %v679
        %v696 = vadd.f32 %v644, %v680
        %v697 = vld [vmem:[%s586 + $0x2] sm:$0xff]
        %v698 = vld [vmem:[%s586 + $0xa] sm:$0xff]
        %v699 = vld [vmem:[%s586 + $0x1a] sm:$0xff]
        %v700 = vld [vmem:[%s586 + $0x22] sm:$0xff]
        %v701 = vld [vmem:[%s586 + $0x32] sm:$0xff]
        %v702 = vld [vmem:[%s586 + $0x3a] sm:$0xff]
        %v703 = vld [vmem:[%s586 + $0x4a] sm:$0xff]
        %v704 = vld [vmem:[%s586 + $0x52] sm:$0xff]
        %v705 = vld [vmem:[%s586 + $0x62] sm:$0xff]
        %v706 = vld [vmem:[%s586 + $0x6a] sm:$0xff]
        %v707 = vld [vmem:[%s586 + $0x7a] sm:$0xff]
        %v708 = vld [vmem:[%s586 + $0x82] sm:$0xff]
        %v709 = vld [vmem:[%s586 + $0x92] sm:$0xff]
        %v710 = vld [vmem:[%s586 + $0x9a] sm:$0xff]
        %v711 = vld [vmem:[%s586 + $0xaa] sm:$0xff]
        %v712 = vld [vmem:[%s586 + $0xb2] sm:$0xff]
        %v713 = vlaneseq
        %v714 = vshrl.u32 %v713, 7
        %v715 = vsub.s32 2, %v714
        %v716 = vrot.slane %v572, %v715
        %v717 = vmul.f32 %v697, %v716
        %v718 = vmul.f32 %v698, %v716
        %v719 = vmul.f32 %v699, %v716
        %v720 = vmul.f32 %v700, %v716
        %v721 = vmul.f32 %v701, %v716
        %v722 = vmul.f32 %v702, %v716
        %v723 = vmul.f32 %v703, %v716
        %v724 = vmul.f32 %v704, %v716
        %v725 = vmul.f32 %v705, %v716
        %v726 = vmul.f32 %v706, %v716
        %v727 = vmul.f32 %v707, %v716
        %v728 = vmul.f32 %v708, %v716
        %v729 = vmul.f32 %v709, %v716
        %v730 = vmul.f32 %v710, %v716
        %v731 = vmul.f32 %v711, %v716
        %v732 = vmul.f32 %v712, %v716
        %v733 = vadd.f32 %v681, %v717
        %v734 = vadd.f32 %v682, %v718
        %v735 = vadd.f32 %v683, %v719
        %v736 = vadd.f32 %v684, %v720
        %v737 = vadd.f32 %v685, %v721
        %v738 = vadd.f32 %v686, %v722
        %v739 = vadd.f32 %v687, %v723
        %v740 = vadd.f32 %v688, %v724
        %v741 = vadd.f32 %v689, %v725
        %v742 = vadd.f32 %v690, %v726
        %v743 = vadd.f32 %v691, %v727
        %v744 = vadd.f32 %v692, %v728
        %v745 = vadd.f32 %v693, %v729
        %v746 = vadd.f32 %v694, %v730
        %v747 = vadd.f32 %v695, %v731
        %v748 = vadd.f32 %v696, %v732
        %s749 = sadd.s32 %s584, 1
        %s750 = smul.u32 %s749, 24
        %s751 = scalar_lea.vmem [#allocation2], %s750
        %v752 = vld [vmem:[%s751] sm:$0xff]
        %v753 = vld [vmem:[%s751 + $0x8] sm:$0xff]
        %v754 = vld [vmem:[%s751 + $0x18] sm:$0xff]
        %v755 = vld [vmem:[%s751 + $0x20] sm:$0xff]
        %v756 = vld [vmem:[%s751 + $0x30] sm:$0xff]
        %v757 = vld [vmem:[%s751 + $0x38] sm:$0xff]
        %v758 = vld [vmem:[%s751 + $0x48] sm:$0xff]
        %v759 = vld [vmem:[%s751 + $0x50] sm:$0xff]
        %v760 = vld [vmem:[%s751 + $0x60] sm:$0xff]
        %v761 = vld [vmem:[%s751 + $0x68] sm:$0xff]
        %v762 = vld [vmem:[%s751 + $0x78] sm:$0xff]
        %v763 = vld [vmem:[%s751 + $0x80] sm:$0xff]
        %v764 = vld [vmem:[%s751 + $0x90] sm:$0xff]
        %v765 = vld [vmem:[%s751 + $0x98] sm:$0xff]
        %v766 = vld [vmem:[%s751 + $0xa8] sm:$0xff]
        %v767 = vld [vmem:[%s751 + $0xb0] sm:$0xff]
        %v768 = vlaneseq
        %v769 = vshrl.u32 %v768, 7
        %v770 = vsub.s32 0, %v769
        %v771 = vrot.slane %v573, %v770
        %v772 = vmul.f32 %v752, %v771
        %v773 = vmul.f32 %v753, %v771
        %v774 = vmul.f32 %v754, %v771
        %v775 = vmul.f32 %v755, %v771
        %v776 = vmul.f32 %v756, %v771
        %v777 = vmul.f32 %v757, %v771
        %v778 = vmul.f32 %v758, %v771
        %v779 = vmul.f32 %v759, %v771
        %v780 = vmul.f32 %v760, %v771
        %v781 = vmul.f32 %v761, %v771
        %v782 = vmul.f32 %v762, %v771
        %v783 = vmul.f32 %v763, %v771
        %v784 = vmul.f32 %v764, %v771
        %v785 = vmul.f32 %v765, %v771
        %v786 = vmul.f32 %v766, %v771
        %v787 = vmul.f32 %v767, %v771
        %v788 = vadd.f32 %v733, %v772
        %v789 = vadd.f32 %v734, %v773
        %v790 = vadd.f32 %v735, %v774
        %v791 = vadd.f32 %v736, %v775
        %v792 = vadd.f32 %v737, %v776
        %v793 = vadd.f32 %v738, %v777
        %v794 = vadd.f32 %v739, %v778
        %v795 = vadd.f32 %v740, %v779
        %v796 = vadd.f32 %v741, %v780
        %v797 = vadd.f32 %v742, %v781
        %v798 = vadd.f32 %v743, %v782
        %v799 = vadd.f32 %v744, %v783
        %v800 = vadd.f32 %v745, %v784
        %v801 = vadd.f32 %v746, %v785
        %v802 = vadd.f32 %v747, %v786
        %v803 = vadd.f32 %v748, %v787
        %v804 = vld [vmem:[%s751 + $0x1] sm:$0xff]
        %v805 = vld [vmem:[%s751 + $0x9] sm:$0xff]
        %v806 = vld [vmem:[%s751 + $0x19] sm:$0xff]
        %v807 = vld [vmem:[%s751 + $0x21] sm:$0xff]
        %v808 = vld [vmem:[%s751 + $0x31] sm:$0xff]
        %v809 = vld [vmem:[%s751 + $0x39] sm:$0xff]
        %v810 = vld [vmem:[%s751 + $0x49] sm:$0xff]
        %v811 = vld [vmem:[%s751 + $0x51] sm:$0xff]
        %v812 = vld [vmem:[%s751 + $0x61] sm:$0xff]
        %v813 = vld [vmem:[%s751 + $0x69] sm:$0xff]
        %v814 = vld [vmem:[%s751 + $0x79] sm:$0xff]
        %v815 = vld [vmem:[%s751 + $0x81] sm:$0xff]
        %v816 = vld [vmem:[%s751 + $0x91] sm:$0xff]
        %v817 = vld [vmem:[%s751 + $0x99] sm:$0xff]
        %v818 = vld [vmem:[%s751 + $0xa9] sm:$0xff]
        %v819 = vld [vmem:[%s751 + $0xb1] sm:$0xff]
        %v820 = vlaneseq
        %v821 = vshrl.u32 %v820, 7
        %v822 = vsub.s32 1, %v821
        %v823 = vrot.slane %v573, %v822
        %v824 = vmul.f32 %v804, %v823
        %v825 = vmul.f32 %v805, %v823
        %v826 = vmul.f32 %v806, %v823
        %v827 = vmul.f32 %v807, %v823
        %v828 = vmul.f32 %v808, %v823
        %v829 = vmul.f32 %v809, %v823
        %v830 = vmul.f32 %v810, %v823
        %v831 = vmul.f32 %v811, %v823
        %v832 = vmul.f32 %v812, %v823
        %v833 = vmul.f32 %v813, %v823
        %v834 = vmul.f32 %v814, %v823
        %v835 = vmul.f32 %v815, %v823
        %v836 = vmul.f32 %v816, %v823
        %v837 = vmul.f32 %v817, %v823
        %v838 = vmul.f32 %v818, %v823
        %v839 = vmul.f32 %v819, %v823
        %v840 = vadd.f32 %v788, %v824
        %v841 = vadd.f32 %v789, %v825
        %v842 = vadd.f32 %v790, %v826
        %v843 = vadd.f32 %v791, %v827
        %v844 = vadd.f32 %v792, %v828
        %v845 = vadd.f32 %v793, %v829
        %v846 = vadd.f32 %v794, %v830
        %v847 = vadd.f32 %v795, %v831
        %v848 = vadd.f32 %v796, %v832
        %v849 = vadd.f32 %v797, %v833
        %v850 = vadd.f32 %v798, %v834
        %v851 = vadd.f32 %v799, %v835
        %v852 = vadd.f32 %v800, %v836
        %v853 = vadd.f32 %v801, %v837
        %v854 = vadd.f32 %v802, %v838
        %v855 = vadd.f32 %v803, %v839
        %v856 = vld [vmem:[%s751 + $0x2] sm:$0xff]
        %v857 = vld [vmem:[%s751 + $0xa] sm:$0xff]
        %v858 = vld [vmem:[%s751 + $0x1a] sm:$0xff]
        %v859 = vld [vmem:[%s751 + $0x22] sm:$0xff]
        %v860 = vld [vmem:[%s751 + $0x32] sm:$0xff]
        %v861 = vld [vmem:[%s751 + $0x3a] sm:$0xff]
        %v862 = vld [vmem:[%s751 + $0x4a] sm:$0xff]
        %v863 = vld [vmem:[%s751 + $0x52] sm:$0xff]
        %v864 = vld [vmem:[%s751 + $0x62] sm:$0xff]
        %v865 = vld [vmem:[%s751 + $0x6a] sm:$0xff]
        %v866 = vld [vmem:[%s751 + $0x7a] sm:$0xff]
        %v867 = vld [vmem:[%s751 + $0x82] sm:$0xff]
        %v868 = vld [vmem:[%s751 + $0x92] sm:$0xff]
        %v869 = vld [vmem:[%s751 + $0x9a] sm:$0xff]
        %v870 = vld [vmem:[%s751 + $0xaa] sm:$0xff]
        %v871 = vld [vmem:[%s751 + $0xb2] sm:$0xff]
        %v872 = vlaneseq
        %v873 = vshrl.u32 %v872, 7
        %v874 = vsub.s32 2, %v873
        %v875 = vrot.slane %v573, %v874
        %v876 = vmul.f32 %v856, %v875
        %v877 = vmul.f32 %v857, %v875
        %v878 = vmul.f32 %v858, %v875
        %v879 = vmul.f32 %v859, %v875
        %v880 = vmul.f32 %v860, %v875
        %v881 = vmul.f32 %v861, %v875
        %v882 = vmul.f32 %v862, %v875
        %v883 = vmul.f32 %v863, %v875
        %v884 = vmul.f32 %v864, %v875
        %v885 = vmul.f32 %v865, %v875
        %v886 = vmul.f32 %v866, %v875
        %v887 = vmul.f32 %v867, %v875
        %v888 = vmul.f32 %v868, %v875
        %v889 = vmul.f32 %v869, %v875
        %v890 = vmul.f32 %v870, %v875
        %v891 = vmul.f32 %v871, %v875
        %v892 = vadd.f32 %v840, %v876
        %v893 = vadd.f32 %v841, %v877
        %v894 = vadd.f32 %v842, %v878
        %v895 = vadd.f32 %v843, %v879
        %v896 = vadd.f32 %v844, %v880
        %v897 = vadd.f32 %v845, %v881
        %v898 = vadd.f32 %v846, %v882
        %v899 = vadd.f32 %v847, %v883
        %v900 = vadd.f32 %v848, %v884
        %v901 = vadd.f32 %v849, %v885
        %v902 = vadd.f32 %v850, %v886
        %v903 = vadd.f32 %v851, %v887
        %v904 = vadd.f32 %v852, %v888
        %v905 = vadd.f32 %v853, %v889
        %v906 = vadd.f32 %v854, %v890
        %v907 = vadd.f32 %v855, %v891
        %s908 = sadd.s32 %s584, 2
        %s909 = smul.u32 %s908, 24
        %s910 = scalar_lea.vmem [#allocation2], %s909
        %v911 = vld [vmem:[%s910] sm:$0xff]
        %v912 = vld [vmem:[%s910 + $0x8] sm:$0xff]
        %v913 = vld [vmem:[%s910 + $0x18] sm:$0xff]
        %v914 = vld [vmem:[%s910 + $0x20] sm:$0xff]
        %v915 = vld [vmem:[%s910 + $0x30] sm:$0xff]
        %v916 = vld [vmem:[%s910 + $0x38] sm:$0xff]
        %v917 = vld [vmem:[%s910 + $0x48] sm:$0xff]
        %v918 = vld [vmem:[%s910 + $0x50] sm:$0xff]
        %v919 = vld [vmem:[%s910 + $0x60] sm:$0xff]
        %v920 = vld [vmem:[%s910 + $0x68] sm:$0xff]
        %v921 = vld [vmem:[%s910 + $0x78] sm:$0xff]
        %v922 = vld [vmem:[%s910 + $0x80] sm:$0xff]
        %v923 = vld [vmem:[%s910 + $0x90] sm:$0xff]
        %v924 = vld [vmem:[%s910 + $0x98] sm:$0xff]
        %v925 = vld [vmem:[%s910 + $0xa8] sm:$0xff]
        %v926 = vld [vmem:[%s910 + $0xb0] sm:$0xff]
        %v927 = vlaneseq
        %v928 = vshrl.u32 %v927, 7
        %v929 = vsub.s32 0, %v928
        %v930 = vrot.slane %v574, %v929
        %v931 = vmul.f32 %v911, %v930
        %v932 = vmul.f32 %v912, %v930
        %v933 = vmul.f32 %v913, %v930
        %v934 = vmul.f32 %v914, %v930
        %v935 = vmul.f32 %v915, %v930
        %v936 = vmul.f32 %v916, %v930
        %v937 = vmul.f32 %v917, %v930
        %v938 = vmul.f32 %v918, %v930
        %v939 = vmul.f32 %v919, %v930
        %v940 = vmul.f32 %v920, %v930
        %v941 = vmul.f32 %v921, %v930
        %v942 = vmul.f32 %v922, %v930
        %v943 = vmul.f32 %v923, %v930
        %v944 = vmul.f32 %v924, %v930
        %v945 = vmul.f32 %v925, %v930
        %v946 = vmul.f32 %v926, %v930
        %v947 = vadd.f32 %v892, %v931
        %v948 = vadd.f32 %v893, %v932
        %v949 = vadd.f32 %v894, %v933
        %v950 = vadd.f32 %v895, %v934
        %v951 = vadd.f32 %v896, %v935
        %v952 = vadd.f32 %v897, %v936
        %v953 = vadd.f32 %v898, %v937
        %v954 = vadd.f32 %v899, %v938
        %v955 = vadd.f32 %v900, %v939
        %v956 = vadd.f32 %v901, %v940
        %v957 = vadd.f32 %v902, %v941
        %v958 = vadd.f32 %v903, %v942
        %v959 = vadd.f32 %v904, %v943
        %v960 = vadd.f32 %v905, %v944
        %v961 = vadd.f32 %v906, %v945
        %v962 = vadd.f32 %v907, %v946
        %v963 = vld [vmem:[%s910 + $0x1] sm:$0xff]
        %v964 = vld [vmem:[%s910 + $0x9] sm:$0xff]
        %v965 = vld [vmem:[%s910 + $0x19] sm:$0xff]
        %v966 = vld [vmem:[%s910 + $0x21] sm:$0xff]
        %v967 = vld [vmem:[%s910 + $0x31] sm:$0xff]
        %v968 = vld [vmem:[%s910 + $0x39] sm:$0xff]
        %v969 = vld [vmem:[%s910 + $0x49] sm:$0xff]
        %v970 = vld [vmem:[%s910 + $0x51] sm:$0xff]
        %v971 = vld [vmem:[%s910 + $0x61] sm:$0xff]
        %v972 = vld [vmem:[%s910 + $0x69] sm:$0xff]
        %v973 = vld [vmem:[%s910 + $0x79] sm:$0xff]
        %v974 = vld [vmem:[%s910 + $0x81] sm:$0xff]
        %v975 = vld [vmem:[%s910 + $0x91] sm:$0xff]
        %v976 = vld [vmem:[%s910 + $0x99] sm:$0xff]
        %v977 = vld [vmem:[%s910 + $0xa9] sm:$0xff]
        %v978 = vld [vmem:[%s910 + $0xb1] sm:$0xff]
        %v979 = vlaneseq
        %v980 = vshrl.u32 %v979, 7
        %v981 = vsub.s32 1, %v980
        %v982 = vrot.slane %v574, %v981
        %v983 = vmul.f32 %v963, %v982
        %v984 = vmul.f32 %v964, %v982
        %v985 = vmul.f32 %v965, %v982
        %v986 = vmul.f32 %v966, %v982
        %v987 = vmul.f32 %v967, %v982
        %v988 = vmul.f32 %v968, %v982
        %v989 = vmul.f32 %v969, %v982
        %v990 = vmul.f32 %v970, %v982
        %v991 = vmul.f32 %v971, %v982
        %v992 = vmul.f32 %v972, %v982
        %v993 = vmul.f32 %v973, %v982
        %v994 = vmul.f32 %v974, %v982
        %v995 = vmul.f32 %v975, %v982
        %v996 = vmul.f32 %v976, %v982
        %v997 = vmul.f32 %v977, %v982
        %v998 = vmul.f32 %v978, %v982
        %v999 = vadd.f32 %v947, %v983
        %v1000 = vadd.f32 %v948, %v984
        %v1001 = vadd.f32 %v949, %v985
        %v1002 = vadd.f32 %v950, %v986
        %v1003 = vadd.f32 %v951, %v987
        %v1004 = vadd.f32 %v952, %v988
        %v1005 = vadd.f32 %v953, %v989
        %v1006 = vadd.f32 %v954, %v990
        %v1007 = vadd.f32 %v955, %v991
        %v1008 = vadd.f32 %v956, %v992
        %v1009 = vadd.f32 %v957, %v993
        %v1010 = vadd.f32 %v958, %v994
        %v1011 = vadd.f32 %v959, %v995
        %v1012 = vadd.f32 %v960, %v996
        %v1013 = vadd.f32 %v961, %v997
        %v1014 = vadd.f32 %v962, %v998
        %v1015 = vld [vmem:[%s910 + $0x2] sm:$0xff]
        %v1016 = vld [vmem:[%s910 + $0xa] sm:$0xff]
        %v1017 = vld [vmem:[%s910 + $0x1a] sm:$0xff]
        %v1018 = vld [vmem:[%s910 + $0x22] sm:$0xff]
        %v1019 = vld [vmem:[%s910 + $0x32] sm:$0xff]
        %v1020 = vld [vmem:[%s910 + $0x3a] sm:$0xff]
        %v1021 = vld [vmem:[%s910 + $0x4a] sm:$0xff]
        %v1022 = vld [vmem:[%s910 + $0x52] sm:$0xff]
        %v1023 = vld [vmem:[%s910 + $0x62] sm:$0xff]
        %v1024 = vld [vmem:[%s910 + $0x6a] sm:$0xff]
        %v1025 = vld [vmem:[%s910 + $0x7a] sm:$0xff]
        %v1026 = vld [vmem:[%s910 + $0x82] sm:$0xff]
        %v1027 = vld [vmem:[%s910 + $0x92] sm:$0xff]
        %v1028 = vld [vmem:[%s910 + $0x9a] sm:$0xff]
        %v1029 = vld [vmem:[%s910 + $0xaa] sm:$0xff]
        %v1030 = vld [vmem:[%s910 + $0xb2] sm:$0xff]
        %v1031 = vlaneseq
        %v1032 = vshrl.u32 %v1031, 7
        %v1033 = vsub.s32 2, %v1032
        %v1034 = vrot.slane %v574, %v1033
        %v1035 = vmul.f32 %v1015, %v1034
        %v1036 = vmul.f32 %v1016, %v1034
        %v1037 = vmul.f32 %v1017, %v1034
        %v1038 = vmul.f32 %v1018, %v1034
        %v1039 = vmul.f32 %v1019, %v1034
        %v1040 = vmul.f32 %v1020, %v1034
        %v1041 = vmul.f32 %v1021, %v1034
        %v1042 = vmul.f32 %v1022, %v1034
        %v1043 = vmul.f32 %v1023, %v1034
        %v1044 = vmul.f32 %v1024, %v1034
        %v1045 = vmul.f32 %v1025, %v1034
        %v1046 = vmul.f32 %v1026, %v1034
        %v1047 = vmul.f32 %v1027, %v1034
        %v1048 = vmul.f32 %v1028, %v1034
        %v1049 = vmul.f32 %v1029, %v1034
        %v1050 = vmul.f32 %v1030, %v1034
        %v1051 = vadd.f32 %v999, %v1035
        %v1052 = vadd.f32 %v1000, %v1036
        %v1053 = vadd.f32 %v1001, %v1037
        %v1054 = vadd.f32 %v1002, %v1038
        %v1055 = vadd.f32 %v1003, %v1039
        %v1056 = vadd.f32 %v1004, %v1040
        %v1057 = vadd.f32 %v1005, %v1041
        %v1058 = vadd.f32 %v1006, %v1042
        %v1059 = vadd.f32 %v1007, %v1043
        %v1060 = vadd.f32 %v1008, %v1044
        %v1061 = vadd.f32 %v1009, %v1045
        %v1062 = vadd.f32 %v1010, %v1046
        %v1063 = vadd.f32 %v1011, %v1047
        %v1064 = vadd.f32 %v1012, %v1048
        %v1065 = vadd.f32 %v1013, %v1049
        %v1066 = vadd.f32 %v1014, %v1050
        %v1067 = vxor.u32 %v1051, 2147483648
        %v1068 = vxor.u32 %v1052, 2147483648
        %v1069 = vxor.u32 %v1053, 2147483648
        %v1070 = vxor.u32 %v1054, 2147483648
        %v1071 = vxor.u32 %v1055, 2147483648
        %v1072 = vxor.u32 %v1056, 2147483648
        %v1073 = vxor.u32 %v1057, 2147483648
        %v1074 = vxor.u32 %v1058, 2147483648
        %v1075 = vxor.u32 %v1059, 2147483648
        %v1076 = vxor.u32 %v1060, 2147483648
        %v1077 = vxor.u32 %v1061, 2147483648
        %v1078 = vxor.u32 %v1062, 2147483648
        %v1079 = vxor.u32 %v1063, 2147483648
        %v1080 = vxor.u32 %v1064, 2147483648
        %v1081 = vxor.u32 %v1065, 2147483648
        %v1082 = vxor.u32 %v1066, 2147483648
        %v1083 = vmul.f32 %v1067, 1.442695
        %v1084 = vpow.pop %v1083
        %v1085 = vmul.f32 %v1068, 1.442695
        %v1086 = vpow.pop %v1085
        %v1087 = vmul.f32 %v1069, 1.442695
        %v1088 = vpow.pop %v1087
        %v1089 = vmul.f32 %v1070, 1.442695
        %v1090 = vpow.pop %v1089
        %v1091 = vmul.f32 %v1071, 1.442695
        %v1092 = vpow.pop %v1091
        %v1093 = vmul.f32 %v1072, 1.442695
        %v1094 = vpow.pop %v1093
        %v1095 = vmul.f32 %v1073, 1.442695
        %v1096 = vpow.pop %v1095
        %v1097 = vmul.f32 %v1074, 1.442695
        %v1098 = vpow.pop %v1097
        %v1099 = vmul.f32 %v1075, 1.442695
        %v1100 = vpow.pop %v1099
        %v1101 = vmul.f32 %v1076, 1.442695
        %v1102 = vpow.pop %v1101
        %v1103 = vmul.f32 %v1077, 1.442695
        %v1104 = vpow.pop %v1103
        %v1105 = vmul.f32 %v1078, 1.442695
        %v1106 = vpow.pop %v1105
        %v1107 = vmul.f32 %v1079, 1.442695
        %v1108 = vpow.pop %v1107
        %v1109 = vmul.f32 %v1080, 1.442695
        %v1110 = vpow.pop %v1109
        %v1111 = vmul.f32 %v1081, 1.442695
        %v1112 = vpow.pop %v1111
        %v1113 = vmul.f32 %v1082, 1.442695
        %v1114 = vpow.pop %v1113
        %v1115 = vadd.f32 %v1084, 1.0
        %v1116 = vadd.f32 %v1086, 1.0
        %v1117 = vadd.f32 %v1088, 1.0
        %v1118 = vadd.f32 %v1090, 1.0
        %v1119 = vadd.f32 %v1092, 1.0
        %v1120 = vadd.f32 %v1094, 1.0
        %v1121 = vadd.f32 %v1096, 1.0
        %v1122 = vadd.f32 %v1098, 1.0
        %v1123 = vadd.f32 %v1100, 1.0
        %v1124 = vadd.f32 %v1102, 1.0
        %v1125 = vadd.f32 %v1104, 1.0
        %v1126 = vadd.f32 %v1106, 1.0
        %v1127 = vadd.f32 %v1108, 1.0
        %v1128 = vadd.f32 %v1110, 1.0
        %v1129 = vadd.f32 %v1112, 1.0
        %v1130 = vadd.f32 %v1114, 1.0
        %v1131 = vrcp.pop %v1115
        %v1132 = vmul.f32 1.0, %v1131
        %v1133 = vrcp.pop %v1116
        %v1134 = vmul.f32 1.0, %v1133
        %v1135 = vrcp.pop %v1117
        %v1136 = vmul.f32 1.0, %v1135
        %v1137 = vrcp.pop %v1118
        %v1138 = vmul.f32 1.0, %v1137
        %v1139 = vrcp.pop %v1119
        %v1140 = vmul.f32 1.0, %v1139
        %v1141 = vrcp.pop %v1120
        %v1142 = vmul.f32 1.0, %v1141
        %v1143 = vrcp.pop %v1121
        %v1144 = vmul.f32 1.0, %v1143
        %v1145 = vrcp.pop %v1122
        %v1146 = vmul.f32 1.0, %v1145
        %v1147 = vrcp.pop %v1123
        %v1148 = vmul.f32 1.0, %v1147
        %v1149 = vrcp.pop %v1124
        %v1150 = vmul.f32 1.0, %v1149
        %v1151 = vrcp.pop %v1125
        %v1152 = vmul.f32 1.0, %v1151
        %v1153 = vrcp.pop %v1126
        %v1154 = vmul.f32 1.0, %v1153
        %v1155 = vrcp.pop %v1127
        %v1156 = vmul.f32 1.0, %v1155
        %v1157 = vrcp.pop %v1128
        %v1158 = vmul.f32 1.0, %v1157
        %v1159 = vrcp.pop %v1129
        %v1160 = vmul.f32 1.0, %v1159
        %v1161 = vrcp.pop %v1130
        %v1162 = vmul.f32 1.0, %v1161
        %v1163 = vmul.f32 %v1051, %v1132
        %v1164 = vmul.f32 %v1052, %v1134
        %v1165 = vmul.f32 %v1053, %v1136
        %v1166 = vmul.f32 %v1054, %v1138
        %v1167 = vmul.f32 %v1055, %v1140
        %v1168 = vmul.f32 %v1056, %v1142
        %v1169 = vmul.f32 %v1057, %v1144
        %v1170 = vmul.f32 %v1058, %v1146
        %v1171 = vmul.f32 %v1059, %v1148
        %v1172 = vmul.f32 %v1060, %v1150
        %v1173 = vmul.f32 %v1061, %v1152
        %v1174 = vmul.f32 %v1062, %v1154
        %v1175 = vmul.f32 %v1063, %v1156
        %v1176 = vmul.f32 %v1064, %v1158
        %v1177 = vmul.f32 %v1065, %v1160
        %v1178 = vmul.f32 %v1066, %v1162
        %v1179 = vpack.c.bf16 %v1164, %v1163
        %v1180 = vpack.c.bf16 %v1166, %v1165
        %v1181 = vpack.c.bf16 %v1168, %v1167
        %v1182 = vpack.c.bf16 %v1170, %v1169
        %v1183 = vpack.c.bf16 %v1172, %v1171
        %v1184 = vpack.c.bf16 %v1174, %v1173
        %v1185 = vpack.c.bf16 %v1176, %v1175
        %v1186 = vpack.c.bf16 %v1178, %v1177
        %s1187 = smul.addr %s584, 8
        %s1188 = scalar_lea.vmem [#allocation3], %s1187
        %1189 = vst [vmem:[%s1188] sm:$0xff] %v1179
        %1190 = vst [vmem:[%s1188 + $0x8] sm:$0xff] %v1180
        %1191 = vst [vmem:[%s1188 + $0x10] sm:$0xff] %v1181
        %1192 = vst [vmem:[%s1188 + $0x18] sm:$0xff] %v1182
        %1193 = vst [vmem:[%s1188 + $0x20] sm:$0xff] %v1183
        %1194 = vst [vmem:[%s1188 + $0x28] sm:$0xff] %v1184
        %1195 = vst [vmem:[%s1188 + $0x30] sm:$0xff] %v1185
        %1196 = vst [vmem:[%s1188 + $0x38] sm:$0xff] %v1186
      $region53: #{depthwise_separable_conv.1} parent=47 // loop_footer
        %s581 = sadd.s32 1, %s577
      $region54: #{depthwise_separable_conv.1} parent=47 // loop_footer_branch
        %576 = sbr.rel target = $region50
      $region55: #{depthwise_separable_conv.1} parent=47 // loop_exit
        _
      %v1197 = vld [vmem:[#allocation3] sm:$0xff]
      %v1198 = vld [vmem:[#allocation3 + $0x8] sm:$0xff]
      %v1199 = vld [vmem:[#allocation3 + $0x10] sm:$0xff]
      %v1200 = vld [vmem:[#allocation3 + $0x18] sm:$0xff]
      %v1201 = vld [vmem:[#allocation3 + $0x20] sm:$0xff]
      %v1202 = vld [vmem:[#allocation3 + $0x28] sm:$0xff]
      %v1203 = vld [vmem:[#allocation3 + $0x30] sm:$0xff]
      %v1204 = vld [vmem:[#allocation3 + $0x38] sm:$0xff]
      %v1205 = vld [vmem:[#allocation3 + $0x40] sm:$0xff]
      %v1206 = vld [vmem:[#allocation3 + $0x48] sm:$0xff]
      %v1207 = vld [vmem:[#allocation3 + $0x50] sm:$0xff]
      %v1208 = vld [vmem:[#allocation3 + $0x58] sm:$0xff]
      %v1209 = vld [vmem:[#allocation3 + $0x60] sm:$0xff]
      %v1210 = vld [vmem:[#allocation3 + $0x68] sm:$0xff]
      %v1211 = vld [vmem:[#allocation3 + $0x70] sm:$0xff]
      %v1212 = vld [vmem:[#allocation3 + $0x78] sm:$0xff]
      %v1213 = vld [vmem:[%s5] sm:$0xf]
      %v1214 = vld [vmem:[%s5 + $0x4] sm:$0xf]
      %v1215 = vld [vmem:[%s5 + $0x8] sm:$0xf]
      %v1216 = vld [vmem:[%s5 + $0xc] sm:$0xf]
      %v1217 = vld [vmem:[%s5 + $0x10] sm:$0xf]
      %v1218 = vld [vmem:[%s5 + $0x14] sm:$0xf]
      %v1219 = vld [vmem:[%s5 + $0x18] sm:$0xf]
      %v1220 = vld [vmem:[%s5 + $0x1c] sm:$0xf]
      %v1221 = vld [vmem:[%s5 + $0x20] sm:$0xf]
      %v1222 = vld [vmem:[%s5 + $0x24] sm:$0xf]
      %v1223 = vld [vmem:[%s5 + $0x28] sm:$0xf]
      %v1224 = vld [vmem:[%s5 + $0x2c] sm:$0xf]
      %v1225 = vld [vmem:[%s5 + $0x30] sm:$0xf]
      %v1226 = vld [vmem:[%s5 + $0x34] sm:$0xf]
      %v1227 = vld [vmem:[%s5 + $0x38] sm:$0xf]
      %v1228 = vld [vmem:[%s5 + $0x3c] sm:$0xf]
      %v1229 = vld [vmem:[%s6] sm:$0x1]
      %v1231 = vlaneseq
      %v1232 = vshrl.u32 %v1231, 7
      %v1233 = vsub.s32 0, %v1232
      %v1234 = vrot.slane %v1229, %v1233
      %v1252 = vunpack.c.l.b16 %v1213
      %v1253 = vunpack.c.l.b16 %v1214
      %v1254 = vunpack.c.l.b16 %v1215
      %v1255 = vunpack.c.l.b16 %v1216
      %v1256 = vunpack.c.l.b16 %v1217
      %v1257 = vunpack.c.l.b16 %v1218
      %v1258 = vunpack.c.l.b16 %v1219
      %v1259 = vunpack.c.l.b16 %v1220
      %v1260 = vunpack.c.l.b16 %v1221
      %v1261 = vunpack.c.l.b16 %v1222
      %v1262 = vunpack.c.l.b16 %v1223
      %v1263 = vunpack.c.l.b16 %v1224
      %v1264 = vunpack.c.l.b16 %v1225
      %v1265 = vunpack.c.l.b16 %v1226
      %v1266 = vunpack.c.l.b16 %v1227
      %v1267 = vunpack.c.l.b16 %v1228
      %v1268 = vpack.c.b16 %v1253, %v1252
      %v1269 = vpack.c.b16 %v1255, %v1254
      %v1270 = vpack.c.b16 %v1257, %v1256
      %v1271 = vpack.c.b16 %v1259, %v1258
      %v1272 = vpack.c.b16 %v1261, %v1260
      %v1273 = vpack.c.b16 %v1263, %v1262
      %v1274 = vpack.c.b16 %v1265, %v1264
      %v1275 = vpack.c.b16 %v1267, %v1266
      %1284 = vmatprep.subr.bf16.mxu0 0
      %1285 = vmatpush1.bf16.msra.mxu0 %v1268
      %1286 = vmatprep.subr.bf16.mxu0 0
      %1287 = vmatpush1.bf16.msra.mxu0 %v1269
      %1288 = vmatprep.subr.bf16.mxu0 0
      %1289 = vmatpush1.bf16.msra.mxu0 %v1270
      %1290 = vmatprep.subr.bf16.mxu0 0
      %1291 = vmatpush1.bf16.msra.mxu0 %v1271
      %1292 = vmatprep.subr.bf16.mxu0 0
      %1293 = vmatpush1.bf16.msra.mxu0 %v1272
      %1294 = vmatprep.subr.bf16.mxu0 0
      %1295 = vmatpush1.bf16.msra.mxu0 %v1273
      %1296 = vmatprep.subr.bf16.mxu0 0
      %1297 = vmatpush1.bf16.msra.mxu0 %v1274
      %1298 = vmatprep.subr.bf16.mxu0 0
      %1299 = vmatpush1.bf16.msra.mxu0 %v1275
      %1300 = vmatprep.subr.bf16.mxu0 0
      %1301 = vmatpush1.bf16.msra.mxu0 0
      %1302 = vmatprep.subr.bf16.mxu0 0
      %1303 = vmatpush1.bf16.msra.mxu0 0
      %1304 = vmatprep.subr.bf16.mxu0 0
      %1305 = vmatpush1.bf16.msra.mxu0 0
      %1306 = vmatprep.subr.bf16.mxu0 0
      %1307 = vmatpush1.bf16.msra.mxu0 0
      %1308 = vmatprep.subr.bf16.mxu0 0
      %1309 = vmatpush1.bf16.msra.mxu0 0
      %1310 = vmatprep.subr.bf16.mxu0 0
      %1311 = vmatpush1.bf16.msra.mxu0 0
      %1312 = vmatprep.subr.bf16.mxu0 0
      %1313 = vmatpush1.bf16.msra.mxu0 0
      %1314 = vmatprep.subr.bf16.mxu0 0
      %1315 = vmatpush1.bf16.msra.mxu0 0
      %1316 = vmatprep.mubr.bf16.mxu0 0
      %1317 = vmatmul.mubr.bf16.gmra.mrb[0].mxu0 %v1197
      %v1318 = vpop.f32.mrb[0].mxu0
      %v1319 = vadd.f32 %v1234, %v1318
      %v1320 = vpop.f32.mrb[0].mxu0
      %v1321 = vpop.f32.mrb[0].mxu0
      %v1322 = vadd.f32 %v1234, %v1321
      %v1323 = vpop.f32.mrb[0].mxu0
      %1324 = vmatprep.mubr.bf16.mxu0 0
      %1325 = vmatmul.mubr.bf16.gmra.mrb[0].mxu0 %v1198
      %v1326 = vpop.f32.mrb[0].mxu0
      %v1327 = vadd.f32 %v1234, %v1326
      %v1328 = vpop.f32.mrb[0].mxu0
      %v1329 = vpop.f32.mrb[0].mxu0
      %v1330 = vadd.f32 %v1234, %v1329
      %v1331 = vpop.f32.mrb[0].mxu0
      %1332 = vmatprep.mubr.bf16.mxu0 0
      %1333 = vmatmul.mubr.bf16.gmra.mrb[0].mxu0 %v1199
      %v1334 = vpop.f32.mrb[0].mxu0
      %v1335 = vadd.f32 %v1234, %v1334
      %v1336 = vpop.f32.mrb[0].mxu0
      %v1337 = vpop.f32.mrb[0].mxu0
      %v1338 = vadd.f32 %v1234, %v1337
      %v1339 = vpop.f32.mrb[0].mxu0
      %1340 = vmatprep.mubr.bf16.mxu0 0
      %1341 = vmatmul.mubr.bf16.gmra.mrb[0].mxu0 %v1200
      %v1342 = vpop.f32.mrb[0].mxu0
      %v1343 = vadd.f32 %v1234, %v1342
      %v1344 = vpop.f32.mrb[0].mxu0
      %v1345 = vpop.f32.mrb[0].mxu0
      %v1346 = vadd.f32 %v1234, %v1345
      %v1347 = vpop.f32.mrb[0].mxu0
      %1348 = vmatprep.mubr.bf16.mxu0 0
      %1349 = vmatmul.mubr.bf16.gmra.mrb[0].mxu0 %v1201
      %v1350 = vpop.f32.mrb[0].mxu0
      %v1351 = vadd.f32 %v1234, %v1350
      %v1352 = vpop.f32.mrb[0].mxu0
      %v1353 = vpop.f32.mrb[0].mxu0
      %v1354 = vadd.f32 %v1234, %v1353
      %v1355 = vpop.f32.mrb[0].mxu0
      %1356 = vmatprep.mubr.bf16.mxu0 0
      %1357 = vmatmul.mubr.bf16.gmra.mrb[0].mxu0 %v1202
      %v1358 = vpop.f32.mrb[0].mxu0
      %v1359 = vadd.f32 %v1234, %v1358
      %v1360 = vpop.f32.mrb[0].mxu0
      %v1361 = vpop.f32.mrb[0].mxu0
      %v1362 = vadd.f32 %v1234, %v1361
      %v1363 = vpop.f32.mrb[0].mxu0
      %1364 = vmatprep.mubr.bf16.mxu0 0
      %1365 = vmatmul.mubr.bf16.gmra.mrb[0].mxu0 %v1203
      %v1366 = vpop.f32.mrb[0].mxu0
      %v1367 = vadd.f32 %v1234, %v1366
      %v1368 = vpop.f32.mrb[0].mxu0
      %v1369 = vpop.f32.mrb[0].mxu0
      %v1370 = vadd.f32 %v1234, %v1369
      %v1371 = vpop.f32.mrb[0].mxu0
      %1372 = vmatprep.mubr.bf16.mxu0 0
      %1373 = vmatmul.mubr.bf16.gmra.mrb[0].mxu0 %v1204
      %v1374 = vpop.f32.mrb[0].mxu0
      %v1375 = vadd.f32 %v1234, %v1374
      %v1376 = vpop.f32.mrb[0].mxu0
      %v1377 = vpop.f32.mrb[0].mxu0
      %v1378 = vadd.f32 %v1234, %v1377
      %v1379 = vpop.f32.mrb[0].mxu0
      %1380 = vmatprep.mubr.bf16.mxu0 0
      %1381 = vmatmul.mubr.bf16.gmra.mrb[0].mxu0 %v1205
      %v1382 = vpop.f32.mrb[0].mxu0
      %v1383 = vadd.f32 %v1234, %v1382
      %v1384 = vpop.f32.mrb[0].mxu0
      %v1385 = vpop.f32.mrb[0].mxu0
      %v1386 = vadd.f32 %v1234, %v1385
      %v1387 = vpop.f32.mrb[0].mxu0
      %1388 = vmatprep.mubr.bf16.mxu0 0
      %1389 = vmatmul.mubr.bf16.gmra.mrb[0].mxu0 %v1206
      %v1390 = vpop.f32.mrb[0].mxu0
      %v1391 = vadd.f32 %v1234, %v1390
      %v1392 = vpop.f32.mrb[0].mxu0
      %v1393 = vpop.f32.mrb[0].mxu0
      %v1394 = vadd.f32 %v1234, %v1393
      %v1395 = vpop.f32.mrb[0].mxu0
      %1396 = vmatprep.mubr.bf16.mxu0 0
      %1397 = vmatmul.mubr.bf16.gmra.mrb[0].mxu0 %v1207
      %v1398 = vpop.f32.mrb[0].mxu0
      %v1399 = vadd.f32 %v1234, %v1398
      %v1400 = vpop.f32.mrb[0].mxu0
      %v1401 = vpop.f32.mrb[0].mxu0
      %v1402 = vadd.f32 %v1234, %v1401
      %v1403 = vpop.f32.mrb[0].mxu0
      %1404 = vmatprep.mubr.bf16.mxu0 0
      %1405 = vmatmul.mubr.bf16.gmra.mrb[0].mxu0 %v1208
      %v1406 = vpop.f32.mrb[0].mxu0
      %v1407 = vadd.f32 %v1234, %v1406
      %v1408 = vpop.f32.mrb[0].mxu0
      %v1409 = vpop.f32.mrb[0].mxu0
      %v1410 = vadd.f32 %v1234, %v1409
      %v1411 = vpop.f32.mrb[0].mxu0
      %1412 = vmatprep.mubr.bf16.mxu0 0
      %1413 = vmatmul.mubr.bf16.gmra.mrb[0].mxu0 %v1209
      %v1414 = vpop.f32.mrb[0].mxu0
      %v1415 = vadd.f32 %v1234, %v1414
      %v1416 = vpop.f32.mrb[0].mxu0
      %v1417 = vpop.f32.mrb[0].mxu0
      %v1418 = vadd.f32 %v1234, %v1417
      %v1419 = vpop.f32.mrb[0].mxu0
      %1420 = vmatprep.mubr.bf16.mxu0 0
      %1421 = vmatmul.mubr.bf16.gmra.mrb[0].mxu0 %v1210
      %v1422 = vpop.f32.mrb[0].mxu0
      %v1423 = vadd.f32 %v1234, %v1422
      %v1424 = vpop.f32.mrb[0].mxu0
      %v1425 = vpop.f32.mrb[0].mxu0
      %v1426 = vadd.f32 %v1234, %v1425
      %v1427 = vpop.f32.mrb[0].mxu0
      %1428 = vmatprep.mubr.bf16.mxu0 0
      %1429 = vmatmul.mubr.bf16.gmra.mrb[0].mxu0 %v1211
      %v1430 = vpop.f32.mrb[0].mxu0
      %v1431 = vadd.f32 %v1234, %v1430
      %v1432 = vpop.f32.mrb[0].mxu0
      %v1433 = vpop.f32.mrb[0].mxu0
      %v1434 = vadd.f32 %v1234, %v1433
      %v1435 = vpop.f32.mrb[0].mxu0
      %1436 = vmatprep.mubr.bf16.mxu0 0
      %1437 = vmatmul.mubr.bf16.gmra.mrb[0].mxu0 %v1212
      %v1438 = vpop.f32.mrb[0].mxu0
      %v1439 = vadd.f32 %v1234, %v1438
      %v1440 = vpop.f32.mrb[0].mxu0
      %v1441 = vpop.f32.mrb[0].mxu0
      %v1442 = vadd.f32 %v1234, %v1441
      %v1443 = vpop.f32.mrb[0].mxu0
      %1444 = vdwg.mxu0
      %v1445 = vxor.u32 %v1319, 2147483648
      %v1446 = vxor.u32 %v1322, 2147483648
      %v1447 = vxor.u32 %v1327, 2147483648
      %v1448 = vxor.u32 %v1330, 2147483648
      %v1449 = vxor.u32 %v1335, 2147483648
      %v1450 = vxor.u32 %v1338, 2147483648
      %v1451 = vxor.u32 %v1343, 2147483648
      %v1452 = vxor.u32 %v1346, 2147483648
      %v1453 = vxor.u32 %v1351, 2147483648
      %v1454 = vxor.u32 %v1354, 2147483648
      %v1455 = vxor.u32 %v1359, 2147483648
      %v1456 = vxor.u32 %v1362, 2147483648
      %v1457 = vxor.u32 %v1367, 2147483648
      %v1458 = vxor.u32 %v1370, 2147483648
      %v1459 = vxor.u32 %v1375, 2147483648
      %v1460 = vxor.u32 %v1378, 2147483648
      %v1461 = vxor.u32 %v1383, 2147483648
      %v1462 = vxor.u32 %v1386, 2147483648
      %v1463 = vxor.u32 %v1391, 2147483648
      %v1464 = vxor.u32 %v1394, 2147483648
      %v1465 = vxor.u32 %v1399, 2147483648
      %v1466 = vxor.u32 %v1402, 2147483648
      %v1467 = vxor.u32 %v1407, 2147483648
      %v1468 = vxor.u32 %v1410, 2147483648
      %v1469 = vxor.u32 %v1415, 2147483648
      %v1470 = vxor.u32 %v1418, 2147483648
      %v1471 = vxor.u32 %v1423, 2147483648
      %v1472 = vxor.u32 %v1426, 2147483648
      %v1473 = vxor.u32 %v1431, 2147483648
      %v1474 = vxor.u32 %v1434, 2147483648
      %v1475 = vxor.u32 %v1439, 2147483648
      %v1476 = vxor.u32 %v1442, 2147483648
      %v1477 = vmul.f32 %v1445, 1.442695
      %v1478 = vpow.pop %v1477
      %v1479 = vmul.f32 %v1446, 1.442695
      %v1480 = vpow.pop %v1479
      %v1481 = vmul.f32 %v1447, 1.442695
      %v1482 = vpow.pop %v1481
      %v1483 = vmul.f32 %v1448, 1.442695
      %v1484 = vpow.pop %v1483
      %v1485 = vmul.f32 %v1449, 1.442695
      %v1486 = vpow.pop %v1485
      %v1487 = vmul.f32 %v1450, 1.442695
      %v1488 = vpow.pop %v1487
      %v1489 = vmul.f32 %v1451, 1.442695
      %v1490 = vpow.pop %v1489
      %v1491 = vmul.f32 %v1452, 1.442695
      %v1492 = vpow.pop %v1491
      %v1493 = vmul.f32 %v1453, 1.442695
      %v1494 = vpow.pop %v1493
      %v1495 = vmul.f32 %v1454, 1.442695
      %v1496 = vpow.pop %v1495
      %v1497 = vmul.f32 %v1455, 1.442695
      %v1498 = vpow.pop %v1497
      %v1499 = vmul.f32 %v1456, 1.442695
      %v1500 = vpow.pop %v1499
      %v1501 = vmul.f32 %v1457, 1.442695
      %v1502 = vpow.pop %v1501
      %v1503 = vmul.f32 %v1458, 1.442695
      %v1504 = vpow.pop %v1503
      %v1505 = vmul.f32 %v1459, 1.442695
      %v1506 = vpow.pop %v1505
      %v1507 = vmul.f32 %v1460, 1.442695
      %v1508 = vpow.pop %v1507
      %v1509 = vmul.f32 %v1461, 1.442695
      %v1510 = vpow.pop %v1509
      %v1511 = vmul.f32 %v1462, 1.442695
      %v1512 = vpow.pop %v1511
      %v1513 = vmul.f32 %v1463, 1.442695
      %v1514 = vpow.pop %v1513
      %v1515 = vmul.f32 %v1464, 1.442695
      %v1516 = vpow.pop %v1515
      %v1517 = vmul.f32 %v1465, 1.442695
      %v1518 = vpow.pop %v1517
      %v1519 = vmul.f32 %v1466, 1.442695
      %v1520 = vpow.pop %v1519
      %v1521 = vmul.f32 %v1467, 1.442695
      %v1522 = vpow.pop %v1521
      %v1523 = vmul.f32 %v1468, 1.442695
      %v1524 = vpow.pop %v1523
      %v1525 = vmul.f32 %v1469, 1.442695
      %v1526 = vpow.pop %v1525
      %v1527 = vmul.f32 %v1470, 1.442695
      %v1528 = vpow.pop %v1527
      %v1529 = vmul.f32 %v1471, 1.442695
      %v1530 = vpow.pop %v1529
      %v1531 = vmul.f32 %v1472, 1.442695
      %v1532 = vpow.pop %v1531
      %v1533 = vmul.f32 %v1473, 1.442695
      %v1534 = vpow.pop %v1533
      %v1535 = vmul.f32 %v1474, 1.442695
      %v1536 = vpow.pop %v1535
      %v1537 = vmul.f32 %v1475, 1.442695
      %v1538 = vpow.pop %v1537
      %v1539 = vmul.f32 %v1476, 1.442695
      %v1540 = vpow.pop %v1539
      %v1541 = vadd.f32 %v1478, 1.0
      %v1542 = vadd.f32 %v1480, 1.0
      %v1543 = vadd.f32 %v1482, 1.0
      %v1544 = vadd.f32 %v1484, 1.0
      %v1545 = vadd.f32 %v1486, 1.0
      %v1546 = vadd.f32 %v1488, 1.0
      %v1547 = vadd.f32 %v1490, 1.0
      %v1548 = vadd.f32 %v1492, 1.0
      %v1549 = vadd.f32 %v1494, 1.0
      %v1550 = vadd.f32 %v1496, 1.0
      %v1551 = vadd.f32 %v1498, 1.0
      %v1552 = vadd.f32 %v1500, 1.0
      %v1553 = vadd.f32 %v1502, 1.0
      %v1554 = vadd.f32 %v1504, 1.0
      %v1555 = vadd.f32 %v1506, 1.0
      %v1556 = vadd.f32 %v1508, 1.0
      %v1557 = vadd.f32 %v1510, 1.0
      %v1558 = vadd.f32 %v1512, 1.0
      %v1559 = vadd.f32 %v1514, 1.0
      %v1560 = vadd.f32 %v1516, 1.0
      %v1561 = vadd.f32 %v1518, 1.0
      %v1562 = vadd.f32 %v1520, 1.0
      %v1563 = vadd.f32 %v1522, 1.0
      %v1564 = vadd.f32 %v1524, 1.0
      %v1565 = vadd.f32 %v1526, 1.0
      %v1566 = vadd.f32 %v1528, 1.0
      %v1567 = vadd.f32 %v1530, 1.0
      %v1568 = vadd.f32 %v1532, 1.0
      %v1569 = vadd.f32 %v1534, 1.0
      %v1570 = vadd.f32 %v1536, 1.0
      %v1571 = vadd.f32 %v1538, 1.0
      %v1572 = vadd.f32 %v1540, 1.0
      %v1573 = vrcp.pop %v1541
      %v1574 = vmul.f32 1.0, %v1573
      %v1575 = vrcp.pop %v1542
      %v1576 = vmul.f32 1.0, %v1575
      %v1577 = vrcp.pop %v1543
      %v1578 = vmul.f32 1.0, %v1577
      %v1579 = vrcp.pop %v1544
      %v1580 = vmul.f32 1.0, %v1579
      %v1581 = vrcp.pop %v1545
      %v1582 = vmul.f32 1.0, %v1581
      %v1583 = vrcp.pop %v1546
      %v1584 = vmul.f32 1.0, %v1583
      %v1585 = vrcp.pop %v1547
      %v1586 = vmul.f32 1.0, %v1585
      %v1587 = vrcp.pop %v1548
      %v1588 = vmul.f32 1.0, %v1587
      %v1589 = vrcp.pop %v1549
      %v1590 = vmul.f32 1.0, %v1589
      %v1591 = vrcp.pop %v1550
      %v1592 = vmul.f32 1.0, %v1591
      %v1593 = vrcp.pop %v1551
      %v1594 = vmul.f32 1.0, %v1593
      %v1595 = vrcp.pop %v1552
      %v1596 = vmul.f32 1.0, %v1595
      %v1597 = vrcp.pop %v1553
      %v1598 = vmul.f32 1.0, %v1597
      %v1599 = vrcp.pop %v1554
      %v1600 = vmul.f32 1.0, %v1599
      %v1601 = vrcp.pop %v1555
      %v1602 = vmul.f32 1.0, %v1601
      %v1603 = vrcp.pop %v1556
      %v1604 = vmul.f32 1.0, %v1603
      %v1605 = vrcp.pop %v1557
      %v1606 = vmul.f32 1.0, %v1605
      %v1607 = vrcp.pop %v1558
      %v1608 = vmul.f32 1.0, %v1607
      %v1609 = vrcp.pop %v1559
      %v1610 = vmul.f32 1.0, %v1609
      %v1611 = vrcp.pop %v1560
      %v1612 = vmul.f32 1.0, %v1611
      %v1613 = vrcp.pop %v1561
      %v1614 = vmul.f32 1.0, %v1613
      %v1615 = vrcp.pop %v1562
      %v1616 = vmul.f32 1.0, %v1615
      %v1617 = vrcp.pop %v1563
      %v1618 = vmul.f32 1.0, %v1617
      %v1619 = vrcp.pop %v1564
      %v1620 = vmul.f32 1.0, %v1619
      %v1621 = vrcp.pop %v1565
      %v1622 = vmul.f32 1.0, %v1621
      %v1623 = vrcp.pop %v1566
      %v1624 = vmul.f32 1.0, %v1623
      %v1625 = vrcp.pop %v1567
      %v1626 = vmul.f32 1.0, %v1625
      %v1627 = vrcp.pop %v1568
      %v1628 = vmul.f32 1.0, %v1627
      %v1629 = vrcp.pop %v1569
      %v1630 = vmul.f32 1.0, %v1629
      %v1631 = vrcp.pop %v1570
      %v1632 = vmul.f32 1.0, %v1631
      %v1633 = vrcp.pop %v1571
      %v1634 = vmul.f32 1.0, %v1633
      %v1635 = vrcp.pop %v1572
      %v1636 = vmul.f32 1.0, %v1635
      %v1637 = vmul.f32 %v1319, %v1574
      %v1638 = vmul.f32 %v1322, %v1576
      %v1639 = vmul.f32 %v1327, %v1578
      %v1640 = vmul.f32 %v1330, %v1580
      %v1641 = vmul.f32 %v1335, %v1582
      %v1642 = vmul.f32 %v1338, %v1584
      %v1643 = vmul.f32 %v1343, %v1586
      %v1644 = vmul.f32 %v1346, %v1588
      %v1645 = vmul.f32 %v1351, %v1590
      %v1646 = vmul.f32 %v1354, %v1592
      %v1647 = vmul.f32 %v1359, %v1594
      %v1648 = vmul.f32 %v1362, %v1596
      %v1649 = vmul.f32 %v1367, %v1598
      %v1650 = vmul.f32 %v1370, %v1600
      %v1651 = vmul.f32 %v1375, %v1602
      %v1652 = vmul.f32 %v1378, %v1604
      %v1653 = vmul.f32 %v1383, %v1606
      %v1654 = vmul.f32 %v1386, %v1608
      %v1655 = vmul.f32 %v1391, %v1610
      %v1656 = vmul.f32 %v1394, %v1612
      %v1657 = vmul.f32 %v1399, %v1614
      %v1658 = vmul.f32 %v1402, %v1616
      %v1659 = vmul.f32 %v1407, %v1618
      %v1660 = vmul.f32 %v1410, %v1620
      %v1661 = vmul.f32 %v1415, %v1622
      %v1662 = vmul.f32 %v1418, %v1624
      %v1663 = vmul.f32 %v1423, %v1626
      %v1664 = vmul.f32 %v1426, %v1628
      %v1665 = vmul.f32 %v1431, %v1630
      %v1666 = vmul.f32 %v1434, %v1632
      %v1667 = vmul.f32 %v1439, %v1634
      %v1668 = vmul.f32 %v1442, %v1636
      %v1669 = vld [vmem:[%s400 + $0x1] sm:$0xff]
      %v1670 = vld [vmem:[%s400 + $0x9] sm:$0xff]
      %v1671 = vld [vmem:[%s400 + $0x19] sm:$0xff]
      %v1672 = vld [vmem:[%s400 + $0x21] sm:$0xff]
      %v1673 = vld [vmem:[%s400 + $0x31] sm:$0xff]
      %v1674 = vld [vmem:[%s400 + $0x39] sm:$0xff]
      %v1675 = vld [vmem:[%s400 + $0x49] sm:$0xff]
      %v1676 = vld [vmem:[%s400 + $0x51] sm:$0xff]
      %v1677 = vld [vmem:[%s400 + $0x61] sm:$0xff]
      %v1678 = vld [vmem:[%s400 + $0x69] sm:$0xff]
      %v1679 = vld [vmem:[%s400 + $0x79] sm:$0xff]
      %v1680 = vld [vmem:[%s400 + $0x81] sm:$0xff]
      %v1681 = vld [vmem:[%s400 + $0x91] sm:$0xff]
      %v1682 = vld [vmem:[%s400 + $0x99] sm:$0xff]
      %v1683 = vld [vmem:[%s400 + $0xa9] sm:$0xff]
      %v1684 = vld [vmem:[%s400 + $0xb1] sm:$0xff]
      %v1685 = vld [vmem:[%s400 + $0xc1] sm:$0xff]
      %v1686 = vld [vmem:[%s400 + $0xc9] sm:$0xff]
      %v1687 = vld [vmem:[%s400 + $0xd9] sm:$0xff]
      %v1688 = vld [vmem:[%s400 + $0xe1] sm:$0xff]
      %v1689 = vld [vmem:[%s400 + $0xf1] sm:$0xff]
      %v1690 = vld [vmem:[%s400 + $0xf9] sm:$0xff]
      %v1691 = vld [vmem:[%s400 + $0x109] sm:$0xff]
      %v1692 = vld [vmem:[%s400 + $0x111] sm:$0xff]
      %v1693 = vld [vmem:[%s400 + $0x121] sm:$0xff]
      %v1694 = vld [vmem:[%s400 + $0x129] sm:$0xff]
      %v1695 = vld [vmem:[%s400 + $0x139] sm:$0xff]
      %v1696 = vld [vmem:[%s400 + $0x141] sm:$0xff]
      %v1697 = vld [vmem:[%s400 + $0x151] sm:$0xff]
      %v1698 = vld [vmem:[%s400 + $0x159] sm:$0xff]
      %v1699 = vld [vmem:[%s400 + $0x169] sm:$0xff]
      %v1700 = vld [vmem:[%s400 + $0x171] sm:$0xff]
      %v1701 = vadd.f32 %v1637, %v1669
      %v1702 = vadd.f32 %v1638, %v1670
      %v1703 = vadd.f32 %v1639, %v1671
      %v1704 = vadd.f32 %v1640, %v1672
      %v1705 = vadd.f32 %v1641, %v1673
      %v1706 = vadd.f32 %v1642, %v1674
      %v1707 = vadd.f32 %v1643, %v1675
      %v1708 = vadd.f32 %v1644, %v1676
      %v1709 = vadd.f32 %v1645, %v1677
      %v1710 = vadd.f32 %v1646, %v1678
      %v1711 = vadd.f32 %v1647, %v1679
      %v1712 = vadd.f32 %v1648, %v1680
      %v1713 = vadd.f32 %v1649, %v1681
      %v1714 = vadd.f32 %v1650, %v1682
      %v1715 = vadd.f32 %v1651, %v1683
      %v1716 = vadd.f32 %v1652, %v1684
      %v1717 = vadd.f32 %v1653, %v1685
      %v1718 = vadd.f32 %v1654, %v1686
      %v1719 = vadd.f32 %v1655, %v1687
      %v1720 = vadd.f32 %v1656, %v1688
      %v1721 = vadd.f32 %v1657, %v1689
      %v1722 = vadd.f32 %v1658, %v1690
      %v1723 = vadd.f32 %v1659, %v1691
      %v1724 = vadd.f32 %v1660, %v1692
      %v1725 = vadd.f32 %v1661, %v1693
      %v1726 = vadd.f32 %v1662, %v1694
      %v1727 = vadd.f32 %v1663, %v1695
      %v1728 = vadd.f32 %v1664, %v1696
      %v1729 = vadd.f32 %v1665, %v1697
      %v1730 = vadd.f32 %v1666, %v1698
      %v1731 = vadd.f32 %v1667, %v1699
      %v1732 = vadd.f32 %v1668, %v1700
      %1733 = vst [vmem:[%s445] sm:$0xff] %v1701
      %1734 = vst [vmem:[%s445 + $0x8] sm:$0xff] %v1702
      %1735 = vst [vmem:[%s445 + $0x10] sm:$0xff] %v1703
      %1736 = vst [vmem:[%s445 + $0x18] sm:$0xff] %v1704
      %1737 = vst [vmem:[%s445 + $0x20] sm:$0xff] %v1705
      %1738 = vst [vmem:[%s445 + $0x28] sm:$0xff] %v1706
      %1739 = vst [vmem:[%s445 + $0x30] sm:$0xff] %v1707
      %1740 = vst [vmem:[%s445 + $0x38] sm:$0xff] %v1708
      %1741 = vst [vmem:[%s445 + $0x40] sm:$0xff] %v1709
      %1742 = vst [vmem:[%s445 + $0x48] sm:$0xff] %v1710
      %1743 = vst [vmem:[%s445 + $0x50] sm:$0xff] %v1711
      %1744 = vst [vmem:[%s445 + $0x58] sm:$0xff] %v1712
      %1745 = vst [vmem:[%s445 + $0x60] sm:$0xff] %v1713
      %1746 = vst [vmem:[%s445 + $0x68] sm:$0xff] %v1714
      %1747 = vst [vmem:[%s445 + $0x70] sm:$0xff] %v1715
      %1748 = vst [vmem:[%s445 + $0x78] sm:$0xff] %v1716
      %1749 = vst [vmem:[%s445 + $0x80] sm:$0xff] %v1717
      %1750 = vst [vmem:[%s445 + $0x88] sm:$0xff] %v1718
      %1751 = vst [vmem:[%s445 + $0x90] sm:$0xff] %v1719
      %1752 = vst [vmem:[%s445 + $0x98] sm:$0xff] %v1720
      %1753 = vst [vmem:[%s445 + $0xa0] sm:$0xff] %v1721
      %1754 = vst [vmem:[%s445 + $0xa8] sm:$0xff] %v1722
      %1755 = vst [vmem:[%s445 + $0xb0] sm:$0xff] %v1723
      %1756 = vst [vmem:[%s445 + $0xb8] sm:$0xff] %v1724
      %1757 = vst [vmem:[%s445 + $0xc0] sm:$0xff] %v1725
      %1758 = vst [vmem:[%s445 + $0xc8] sm:$0xff] %v1726
      %1759 = vst [vmem:[%s445 + $0xd0] sm:$0xff] %v1727
      %1760 = vst [vmem:[%s445 + $0xd8] sm:$0xff] %v1728
      %1761 = vst [vmem:[%s445 + $0xe0] sm:$0xff] %v1729
      %1762 = vst [vmem:[%s445 + $0xe8] sm:$0xff] %v1730
      %1763 = vst [vmem:[%s445 + $0xf0] sm:$0xff] %v1731
      %1764 = vst [vmem:[%s445 + $0xf8] sm:$0xff] %v1732
      %s1765 = smul.u32 16, %s23
      %p1766 = scmp.lt.s32.totalorder %s22, 1
      %s1767 = scalar_select %p1766, %s22, 1
      %p1768 = scmp.lt.s32.totalorder %s1765, 15
      %s1769 = scalar_select %p1768, %s1765, 15
      %s1770 = smul.addr %s1769, 2
      %s1771 = smul.addr %s1767, 32
      %s1772 = sadd.s32 %s1770, %s1771
      %s1773 = smul.addr %s1772, 8
      %s1774 = scalar_lea.vmem %s7, %s1773
      // Predicated region
      $region56: #{depthwise_separable_conv.1} parent=47 // pred_check
        %p1775 = pneg %p234
      $region57: #{depthwise_separable_conv.1} parent=47 // pred_check_branch
        %1777 = sbr.rel (%p1775) target = $region59
      $region58: #{depthwise_separable_conv.1} parent=47 // pred_region
        %s1778 = smul.u32 16, %s23
      $region59: #{depthwise_separable_conv.1} parent=47 // pred_fallthru
        _
    $region48: #{depthwise_separable_conv.1} parent=5 // pred_fallthru
      _
    %p1779 = scmp.le.s32.totalorder 2, %s13
    // Predicated region
    $region60: #{depthwise_separable_conv.1} parent=5 // pred_check
      %p1780 = pneg %p1779
    $region61: #{depthwise_separable_conv.1} parent=5 // pred_check_branch
      %1782 = sbr.rel (%p1780) target = $region63
    $region62: #{depthwise_separable_conv.1} parent=5 // pred_region
      %s1783 = ssub.s32 %s13, 2
      // Predicated region
      $region64: #{depthwise_separable_conv.1} parent=62 // pred_check
        %p1784 = pneg %p240
      $region65: #{depthwise_separable_conv.1} parent=62 // pred_check_branch
        %1786 = sbr.rel (%p1784) target = $region67
      $region66: #{depthwise_separable_conv.1} parent=62 // pred_region
        %s1787 = smul.u32 16, %s25
        %p1788 = scmp.lt.s32.totalorder %s24, 1
        %s1789 = scalar_select %p1788, %s24, 1
        %p1790 = scmp.lt.s32.totalorder %s1787, 15
        %s1791 = scalar_select %p1790, %s1787, 15
        %s1792 = smul.addr %s1791, 2
        %s1793 = smul.addr %s1789, 32
        %s1794 = sadd.s32 %s1792, %s1793
        %s1795 = smul.addr %s1794, 8
        %s1796 = scalar_lea.vmem %s7, %s1795
      $region67: #{depthwise_separable_conv.1} parent=62 // pred_fallthru
        _
    $region63: #{depthwise_separable_conv.1} parent=5 // pred_fallthru
      _
  $region6: #{depthwise_separable_conv.1} parent=0 // loop_footer
    %s17 = sadd.s32 1, %s13
  $region7: #{depthwise_separable_conv.1} parent=0 // loop_footer_branch
    %12 = sbr.rel target = $region3
  $region8: #{depthwise_separable_conv.1} parent=0 // loop_exit
    _

</llo_original>
